<compile_context>
chip_gen: v7x
topology: tpu7x:2x2x1
jax: 0.10.0
libtpu: 0.0.40
codegen_flags: <defaults>
</compile_context>

<pallas_src>
import jax
import jax.numpy as jnp
from jax.experimental import pallas as pl
from jax.experimental.pallas import tpu as pltpu

# ---------------- config (small shapes consistent with the module) ----------
WIDTH = 32          # width of each hidden SIREN layer
DEPTH = 5           # number of SIREN layers (DEPTH-1 modulated layers + output)
DIM_IN = 2          # coordinate dimension
DIM_OUT = 3         # output channels
LATENT_DIM = 16     # latent vector dimension
LAYER_SIZES = (32, 64)   # hidden sizes of the latent->modulation MLP
W0_OMEGA = 1.0      # SIREN w0 (module default)


# ---------------- Pallas kernel ----------------------------------------------
def siren_kernel(x_ref, wb_ref, out_ref):
    """Modulated SIREN MLP over one lane-dense tile of coordinates.

    x_ref  : (DIM_IN, TILE)  coordinates (features on sublanes, points on lanes)
    wb_ref : (DEPTH*WIDTH, WIDTH+1) packed weight/bias slab, resident in VMEM.
             Rows [i*W:(i+1)*W]: cols [0:in_dim] = folded W_i, col [W] = folded b_i.
             FiLM scale/shift, w0 and the final +0.5 are already folded in.
    out_ref: (DIM_OUT, TILE)
    """
    W = WIDTH

    # --- layer 0: K = DIM_IN (=2) -> VPU broadcast-FMA, skip the MXU ---------
    b0 = wb_ref[0:W, W:W + 1]                                  # (W, 1)
    acc = b0 * jnp.ones_like(x_ref[0:1, :])                    # (W, TILE)
    for d in range(DIM_IN):
        acc = acc + wb_ref[0:W, d:d + 1] * x_ref[d:d + 1, :]
    h = jnp.sin(acc)

    # --- hidden layers: (W, W) @ (W, TILE) on the MXU -------------------------
    for i in range(1, DEPTH - 1):
        w = wb_ref[i * W:(i + 1) * W, 0:W]                      # (W, W)
        b = wb_ref[i * W:(i + 1) * W, W:W + 1]                  # (W, 1)
        h = jnp.sin(jnp.dot(w, h, preferred_element_type=jnp.float32) + b)

    # --- output layer (+0.5 folded into bias) ---------------------------------
    r0 = (DEPTH - 1) * W
    w_l = wb_ref[r0:r0 + DIM_OUT, 0:W]                          # (DIM_OUT, W)
    b_l = wb_ref[r0:r0 + DIM_OUT, W:W + 1]                      # (DIM_OUT, 1)
    out_ref[...] = jnp.dot(w_l, h, preferred_element_type=jnp.float32) + b_l


# ---------------- helpers -----------------------------------------------------
def _choose_tile(n):
    """Largest lane-aligned tile that still leaves >= 4 grid steps.

    >= 4 steps -> BlockSpec pipelining can overlap DMA with compute AND v7x's
    two TensorCores each get >= 2 steps.  One tiling for all generations: even
    at TILE=32768 the (double-buffered) working set is ~1.4 MB, far below the
    scoped-VMEM limit on v5e/v6e/v7x.
    """
    for t in (32768, 16384, 8192, 4096, 2048, 1024, 512, 256, 128):
        if -(-n // t) >= 4:
            return t
    return 128


# ---------------- parameter construction (deterministic) --------------------
def init_params(key):
    params = {}
    ks = jax.random.split(key, 16)
    ki = iter(ks)

    # latent -> modulation MLP (nn.Linear default init: U(-1/sqrt(in), 1/sqrt(in)))
    out_size = (DEPTH - 1) * 2 * WIDTH
    sizes = (LATENT_DIM,) + LAYER_SIZES + (out_size,)
    for li in range(len(sizes) - 1):
        fan_in, fan_out = sizes[li], sizes[li + 1]
        bound = 1.0 / (fan_in ** 0.5)
        params[f'wm{li}'] = jax.random.uniform(
            next(ki), (fan_in, fan_out), jnp.float32, -bound, bound)
        params[f'bm{li}'] = jax.random.uniform(
            next(ki), (fan_out,), jnp.float32, -bound, bound)

    # SIREN layer weights in torch layout (out, in):
    #   first layer U(-1/dim_in, 1/dim_in), others U(-sqrt(6/in)/w0, +...),
    #   biases zero (matches the torch module's init).
    siren_dims = [(WIDTH, DIM_IN)] + [(WIDTH, WIDTH)] * (DEPTH - 2) \
                 + [(DIM_OUT, WIDTH)]
    params['w'] = []
    params['b'] = []
    for li, (dout, din) in enumerate(siren_dims):
        init_range = (1.0 / din) if li == 0 else (6.0 / din) ** 0.5 / W0_OMEGA
        params['w'].append(jax.random.uniform(
            next(ki), (dout, din), jnp.float32, -init_range, init_range))
        params['b'].append(jnp.zeros((dout,), jnp.float32))
    return params


# ---------------- wrapper (channel-major fast path) ---------------------------
@jax.jit
def siren_render_cm(coords_cm, latent, params):
    """coords_cm: (DIM_IN, *spatial) channel-major f32; latent: (LATENT_DIM,).

    Returns (*spatial, DIM_OUT).
    """
    spatial_shape = coords_cm.shape[1:]
    x_cm = coords_cm.reshape(DIM_IN, -1).astype(jnp.float32)        # (DIM_IN, N), no transpose
    n = x_cm.shape[1]

    # ---- latent -> modulations: tiny M=1 MLP, plain jnp (no pallas launch) --
    lat = latent.reshape(1, LATENT_DIM)
    h = jnp.maximum(lat @ params['wm0'] + params['bm0'], 0.0)
    h = jnp.maximum(h @ params['wm1'] + params['bm1'], 0.0)
    mods = (h @ params['wm2'] + params['bm2']).reshape(DEPTH - 1, 2, WIDTH)
    scale = mods[:, 0, :] + 1.0                                     # (DEPTH-1, WIDTH)
    shift = mods[:, 1, :]                                           # (DEPTH-1, WIDTH)

    # ---- fold FiLM scale/shift + w0 (+0.5) into weights, pack into ONE slab -
    # Slab layout: (DEPTH*WIDTH, WIDTH+1); rows i*W:(i+1)*W hold layer i,
    # cols [0:in_dim] = folded W, col [W] = folded bias, rest zero-padded.
    rows = []
    for i in range(DEPTH - 1):
        w_f = params['w'][i] * (W0_OMEGA * scale[i])[:, None]       # (W, in_dim)
        b_f = W0_OMEGA * (params['b'][i] * scale[i] + shift[i])     # (W,)
        w_pad = jnp.pad(w_f, ((0, 0), (0, WIDTH - w_f.shape[1])))
        rows.append(jnp.concatenate([w_pad, b_f[:, None]], axis=1))  # (W, W+1)
    w_last = params['w'][DEPTH - 1]                                  # (DIM_OUT, W)
    b_last = params['b'][DEPTH - 1] + 0.5                            # (DIM_OUT,)
    last = jnp.concatenate([w_last, b_last[:, None]], axis=1)        # (DIM_OUT, W+1)
    rows.append(jnp.pad(last, ((0, WIDTH - DIM_OUT), (0, 0))))       # (W, W+1)
    wb_slab = jnp.concatenate(rows, axis=0)                          # (DEPTH*W, W+1)

    # ---- tiling: big lane-dense tiles, >= 4 grid steps, even step count -----
    tile = _choose_tile(n)
    steps = -(-n // tile)
    if steps % 2:
        steps += 1            # even split across v7x's two TensorCores
    n_pad = steps * tile
    if n_pad != n:
        x_cm = jnp.pad(x_cm, ((0, 0), (0, n_pad - n)))

    cost = pl.CostEstimate(
        flops=2 * n_pad * (WIDTH * DIM_IN
                           + (DEPTH - 2) * WIDTH * WIDTH
                           + DIM_OUT * WIDTH),
        transcendentals=(DEPTH - 1) * WIDTH * n_pad,
        bytes_accessed=(DIM_IN + DIM_OUT) * 4 * n_pad + 4 * wb_slab.size,
    )

    out_cm = pl.pallas_call(
        siren_kernel,
        out_shape=jax.ShapeDtypeStruct((DIM_OUT, n_pad), jnp.float32),
        grid=(steps,),
        in_specs=[
            pl.BlockSpec((DIM_IN, tile), lambda i: (0, i)),
            # single resident weight slab: constant block index -> one DMA
            pl.BlockSpec(wb_slab.shape, lambda i: (0, 0)),
        ],
        out_specs=pl.BlockSpec((DIM_OUT, tile), lambda i: (0, i)),
        compiler_params=pltpu.CompilerParams(
            dimension_semantics=("parallel",)),
        cost_estimate=cost,
    )(x_cm, wb_slab)                                                 # (DIM_OUT, n_pad)

    out = out_cm[:, :n].T                                            # (N, DIM_OUT)
    return out.reshape(spatial_shape + (DIM_OUT,))


# ---------------- module-layout wrapper (channel-last coords, torch layout) --
@jax.jit
def latent_modulated_siren_forward(coords, latent, params):
    """coords: (..., DIM_IN) as in the torch module. Prefer siren_render_cm
    with channel-major coords to avoid the extra transpose pass."""
    coords_cm = jnp.moveaxis(coords, -1, 0)
    return siren_render_cm(coords_cm, latent, params)


# ---------------- pure-JAX reference (for correctness check) -----------------
def reference_forward(coords, latent, params):
    lat = latent.reshape(1, LATENT_DIM)
    h = jnp.maximum(lat @ params['wm0'] + params['bm0'], 0.0)
    h = jnp.maximum(h @ params['wm1'] + params['bm1'], 0.0)
    mods = (h @ params['wm2'] + params['bm2'])[0]

    x = coords.reshape(-1, DIM_IN)
    for i in range(DEPTH - 1):
        x = x @ params['w'][i].T + params['b'][i]
        start = 2 * WIDTH * i
        scl = mods[start:start + WIDTH] + 1.0
        sft = mods[start + WIDTH:start + 2 * WIDTH]
        x = scl * x + sft
        x = jnp.sin(W0_OMEGA * x)
    x = x @ params['w'][DEPTH - 1].T + params['b'][DEPTH - 1] + 0.5
    return x.reshape(coords.shape[:-1] + (DIM_OUT,))


# ---------------- main --------------------------------------------------------
if __name__ == "__main__":
    key = jax.random.PRNGKey(0)
    k_par, k_lat = jax.random.split(key, 2)

    params = init_params(k_par)
    latent = 0.01 * jax.random.normal(k_lat, (LATENT_DIM,), jnp.float32)

    def make_coords_cm(h, w):
        # channel-major coordinate grid: (DIM_IN, h, w) -- no transpose needed
        ly = jnp.linspace(-1.0, 1.0, h)
        lx = jnp.linspace(-1.0, 1.0, w)
        yy, xx = jnp.meshgrid(ly, lx, indexing="ij")
        return jnp.stack([yy, xx], axis=0).astype(jnp.float32)

    # 16x16 (256 pts: small-grid fallback path), 20x20 (400 pts: padding path),
    # 256x256 (65536 pts: large-tile / >=4-step path).
    for (hh, ww) in [(16, 16), (20, 20), (256, 256)]:
        coords_cm = make_coords_cm(hh, ww)
        out = jax.block_until_ready(siren_render_cm(coords_cm, latent, params))
        ref = reference_forward(jnp.moveaxis(coords_cm, 0, -1), latent, params)
        assert out.shape == (hh, ww, DIM_OUT), out.shape
        err = float(jnp.max(jnp.abs(out - ref)))
        assert err < 1e-4, err

    # module-layout (channel-last) wrapper path.
    coords_cl = jnp.moveaxis(make_coords_cm(20, 20), 0, -1)
    out2 = jax.block_until_ready(
        latent_modulated_siren_forward(coords_cl, latent, params))
    ref2 = reference_forward(coords_cl, latent, params)
    assert out2.shape == (20, 20, DIM_OUT), out2.shape
    assert float(jnp.max(jnp.abs(out2 - ref2))) < 1e-4

    print("KERNEL_OK")
</pallas_src>

<mosaic_0001>
module attributes {stable_mosaic.version = 11 : i64} {
  func.func @siren_kernel(%arg0: i32, %arg1: memref<2x128xf32, #tpu.memory_space<vmem>>, %arg2: memref<160x33xf32, #tpu.memory_space<vmem>>, %arg3: memref<3x128xf32, #tpu.memory_space<vmem>>) attributes {dimension_semantics = [#tpu.dimension_semantics<parallel>], iteration_bounds = array<i64: 2>, scalar_prefetch = 0 : i64, scratch_operands = 0 : i64, tpu.core_type = #tpu.core_type<tc>, window_params = [{transform_indices = @transform_0, window_bounds = array<i64: 2, 128>}, {pipeline_mode = #tpu.pipeline_mode<synchronous>, transform_indices = @transform_1, window_bounds = array<i64: 160, 33>}, {transform_indices = @transform_2, window_bounds = array<i64: 3, 128>}]} {
    %c0 = arith.constant 0 : index
    %c32 = arith.constant 32 : index
    %0 = vector.load %arg2[%c0, %c32] : memref<160x33xf32, #tpu.memory_space<vmem>>, vector<32x1xf32>
    %cst = arith.constant 1.000000e+00 : f32
    %1 = vector.broadcast %cst : f32 to vector<1x128xf32>
    %2 = vector.broadcast %0 : vector<32x1xf32> to vector<32x128xf32>
    %3 = vector.broadcast %1 : vector<1x128xf32> to vector<32x128xf32>
    %4 = arith.mulf %2, %3 : vector<32x128xf32>
    %c0_0 = arith.constant 0 : index
    %c0_1 = arith.constant 0 : index
    %5 = vector.load %arg2[%c0_0, %c0_1] : memref<160x33xf32, #tpu.memory_space<vmem>>, vector<32x1xf32>
    %c0_2 = arith.constant 0 : index
    %c0_3 = arith.constant 0 : index
    %6 = vector.load %arg1[%c0_2, %c0_3] : memref<2x128xf32, #tpu.memory_space<vmem>>, vector<1x128xf32>
    %7 = vector.broadcast %5 : vector<32x1xf32> to vector<32x128xf32>
    %8 = vector.broadcast %6 : vector<1x128xf32> to vector<32x128xf32>
    %9 = arith.mulf %7, %8 : vector<32x128xf32>
    %10 = arith.addf %4, %9 : vector<32x128xf32>
    %c0_4 = arith.constant 0 : index
    %c1 = arith.constant 1 : index
    %11 = vector.load %arg2[%c0_4, %c1] : memref<160x33xf32, #tpu.memory_space<vmem>>, vector<32x1xf32>
    %c1_5 = arith.constant 1 : index
    %c0_6 = arith.constant 0 : index
    %12 = vector.load %arg1[%c1_5, %c0_6] : memref<2x128xf32, #tpu.memory_space<vmem>>, vector<1x128xf32>
    %13 = vector.broadcast %11 : vector<32x1xf32> to vector<32x128xf32>
    %14 = vector.broadcast %12 : vector<1x128xf32> to vector<32x128xf32>
    %15 = arith.mulf %13, %14 : vector<32x128xf32>
    %16 = arith.addf %10, %15 : vector<32x128xf32>
    %17 = math.sin %16 : vector<32x128xf32>
    %c32_7 = arith.constant 32 : index
    %c0_8 = arith.constant 0 : index
    %18 = vector.load %arg2[%c32_7, %c0_8] : memref<160x33xf32, #tpu.memory_space<vmem>>, vector<32x32xf32>
    %c32_9 = arith.constant 32 : index
    %c32_10 = arith.constant 32 : index
    %19 = vector.load %arg2[%c32_9, %c32_10] : memref<160x33xf32, #tpu.memory_space<vmem>>, vector<32x1xf32>
    %cst_11 = arith.constant dense<0.000000e+00> : vector<32x128xf32>
    %20 = tpu.matmul %18, %17, %cst_11 {dimension_numbers = #tpu.dot_dimension_numbers<[1], [0], [0], [1], [0, 0, 1, 1], [], []>} : vector<32x32xf32>, vector<32x128xf32>, vector<32x128xf32> -> vector<32x128xf32>
    %21 = vector.broadcast %19 : vector<32x1xf32> to vector<32x128xf32>
    %22 = arith.addf %20, %21 : vector<32x128xf32>
    %23 = math.sin %22 : vector<32x128xf32>
    %c64 = arith.constant 64 : index
    %c0_12 = arith.constant 0 : index
    %24 = vector.load %arg2[%c64, %c0_12] : memref<160x33xf32, #tpu.memory_space<vmem>>, vector<32x32xf32>
    %c64_13 = arith.constant 64 : index
    %c32_14 = arith.constant 32 : index
    %25 = vector.load %arg2[%c64_13, %c32_14] : memref<160x33xf32, #tpu.memory_space<vmem>>, vector<32x1xf32>
    %cst_15 = arith.constant dense<0.000000e+00> : vector<32x128xf32>
    %26 = tpu.matmul %24, %23, %cst_15 {dimension_numbers = #tpu.dot_dimension_numbers<[1], [0], [0], [1], [0, 0, 1, 1], [], []>} : vector<32x32xf32>, vector<32x128xf32>, vector<32x128xf32> -> vector<32x128xf32>
    %27 = vector.broadcast %25 : vector<32x1xf32> to vector<32x128xf32>
    %28 = arith.addf %26, %27 : vector<32x128xf32>
    %29 = math.sin %28 : vector<32x128xf32>
    %c96 = arith.constant 96 : index
    %c0_16 = arith.constant 0 : index
    %30 = vector.load %arg2[%c96, %c0_16] : memref<160x33xf32, #tpu.memory_space<vmem>>, vector<32x32xf32>
    %c96_17 = arith.constant 96 : index
    %c32_18 = arith.constant 32 : index
    %31 = vector.load %arg2[%c96_17, %c32_18] : memref<160x33xf32, #tpu.memory_space<vmem>>, vector<32x1xf32>
    %cst_19 = arith.constant dense<0.000000e+00> : vector<32x128xf32>
    %32 = tpu.matmul %30, %29, %cst_19 {dimension_numbers = #tpu.dot_dimension_numbers<[1], [0], [0], [1], [0, 0, 1, 1], [], []>} : vector<32x32xf32>, vector<32x128xf32>, vector<32x128xf32> -> vector<32x128xf32>
    %33 = vector.broadcast %31 : vector<32x1xf32> to vector<32x128xf32>
    %34 = arith.addf %32, %33 : vector<32x128xf32>
    %35 = math.sin %34 : vector<32x128xf32>
    %c128 = arith.constant 128 : index
    %c0_20 = arith.constant 0 : index
    %36 = vector.load %arg2[%c128, %c0_20] : memref<160x33xf32, #tpu.memory_space<vmem>>, vector<3x32xf32>
    %c128_21 = arith.constant 128 : index
    %c32_22 = arith.constant 32 : index
    %37 = vector.load %arg2[%c128_21, %c32_22] : memref<160x33xf32, #tpu.memory_space<vmem>>, vector<3x1xf32>
    %cst_23 = arith.constant dense<0.000000e+00> : vector<3x128xf32>
    %38 = tpu.matmul %36, %35, %cst_23 {dimension_numbers = #tpu.dot_dimension_numbers<[1], [0], [0], [1], [0, 0, 1, 1], [], []>} : vector<3x32xf32>, vector<32x128xf32>, vector<3x128xf32> -> vector<3x128xf32>
    %39 = vector.broadcast %37 : vector<3x1xf32> to vector<3x128xf32>
    %40 = arith.addf %38, %39 : vector<3x128xf32>
    %c0_24 = arith.constant 0 : index
    %c0_25 = arith.constant 0 : index
    %41 = vector.load %arg3[%c0_24, %c0_25] : memref<3x128xf32, #tpu.memory_space<vmem>>, vector<3x128xf32>
    tpu.vector_store %arg3[%c0_24, %c0_25], %40 {strides = array<i32>} : memref<3x128xf32, #tpu.memory_space<vmem>>, vector<3x128xf32>,
    return
  }
  func.func @transform_0(%arg0: i32) -> (i32, i32) {
    %c0_i32 = arith.constant 0 : i32
    %c0_i32_0 = arith.constant 0 : i32
    return %c0_i32, %arg0 : i32, i32
  }
  func.func @transform_1(%arg0: i32) -> (i32, i32) {
    %c0_i32 = arith.constant 0 : i32
    %c0_i32_0 = arith.constant 0 : i32
    %c0_i32_1 = arith.constant 0 : i32
    return %c0_i32, %c0_i32_0 : i32, i32
  }
  func.func @transform_2(%arg0: i32) -> (i32, i32) {
    %c0_i32 = arith.constant 0 : i32
    %c0_i32_0 = arith.constant 0 : i32
    return %c0_i32, %arg0 : i32, i32
  }
}

</mosaic_0001>

<llo_original>
// kernel: siren_render_cm.1
$region0: #{siren_render_cm.1}
  #allocation0 [shape = 'u32[]', space=smem, size = 0x4, offset = 0x4, fixed_abs, tag = 'smem constant byte address 0x4 - core index']
  #allocation1 [shape = 'u32[144,128]{1,0:T(1,128)}', space=vmem, size = 0x12000, scoped, tag = 'internal scratch']
  %s0 = inlined_call_operand.vmem [shape: f32[2,256], index: 0, kind: input, shape index: {}]
  %s1 = inlined_call_operand.vmem [shape: f32[160,33], index: 1, kind: input, shape index: {}]
  %s2 = inlined_call_operand.vmem [shape: f32[3,256], index: 2, kind: output, shape index: {}]
  %s3 = sld [smem:[#allocation0]]
  $region41: #{siren_render_cm.1} parent=0
    _
  %s5 = ssub.s32 1, %s3
  %s6 = scalar_select 0, %s5, %s3
  loop: start=0, step=1, limit=4
  $region2: #{siren_render_cm.1} parent=0 // loop_pre_header
    _
  $region3: #{siren_render_cm.1} parent=0 // loop_header
    %s8 = sphi 0, %s12
    %p9 = scmp.ge.s32.totalorder %s8, 4
    %s18 = sphi 0, %s20
    %s21 = sphi 0, %s18
    %s22 = sphi 0, %s21
    %s38 = sphi 0, %s22
    %s42 = sphi 0, %s42
    %s44 = sphi 0, %s42
    %s45 = sphi 0, %s44
    %s59 = sphi 0, %s45
    %s65 = sphi 0, %s67
    %s68 = sphi 0, %s65
    %s69 = sphi 0, %s68
    %s85 = sphi 0, %s69
  $region4: #{siren_render_cm.1} parent=0 // loop_header_branch
    %11 = sbr.rel (%p9) target = $region8
  $region5: #{siren_render_cm.1} parent=0 // loop_body
    %s13 = ssub.s32 %s8, 1
    %s14 = ssub.s32 %s8, 2
    %s15 = sadd.s32 %s8, 1
    %s16 = ssub.s32 %s8, %s15
    %p17 = scmp.eq.s32.totalorder %s16, 0
    %s19 = sadd.s32 %s18, 1
    %s20 = scalar_select %p17, %s18, %s19
    %p23 = pneg %p17
    %p24 = scmp.eq.s32.totalorder %s8, 1
    %p25 = por %p23, %p24
    %p26 = scmp.ne.s32.totalorder %s18, %s21
    %p27 = scmp.eq.s32.totalorder %s8, 0
    %p28 = por %p26, %p27
    %p29 = scmp.ne.s32.totalorder %s18, %s21
    %p30 = scmp.eq.s32.totalorder %s13, 1
    %p31 = por %p29, %p30
    %p32 = scmp.ne.s32.totalorder %s21, %s22
    %p33 = scmp.eq.s32.totalorder %s13, 0
    %p34 = por %p32, %p33
    %p35 = scmp.ne.s32.totalorder %s21, %s22
    %p36 = scmp.eq.s32.totalorder %s14, 1
    %p37 = por %p35, %p36
    %p39 = scmp.ne.s32.totalorder %s22, %s38
    %p40 = scmp.eq.s32.totalorder %s14, 0
    %p41 = por %p39, %p40
    %s43 = sadd.s32 %s42, 1
    %p46 = scmp.eq.s32.totalorder %s8, 1
    %p47 = scmp.ne.s32.totalorder %s42, %s44
    %p48 = scmp.eq.s32.totalorder %s8, 0
    %p49 = por %p47, %p48
    %p50 = scmp.ne.s32.totalorder %s42, %s44
    %p51 = scmp.eq.s32.totalorder %s13, 1
    %p52 = por %p50, %p51
    %p53 = scmp.ne.s32.totalorder %s44, %s45
    %p54 = scmp.eq.s32.totalorder %s13, 0
    %p55 = por %p53, %p54
    %p56 = scmp.ne.s32.totalorder %s44, %s45
    %p57 = scmp.eq.s32.totalorder %s14, 1
    %p58 = por %p56, %p57
    %p60 = scmp.ne.s32.totalorder %s45, %s59
    %p61 = scmp.eq.s32.totalorder %s14, 0
    %p62 = por %p60, %p61
    %s63 = ssub.s32 %s8, %s15
    %p64 = scmp.eq.s32.totalorder %s63, 0
    %s66 = sadd.s32 %s65, 1
    %s67 = scalar_select %p64, %s65, %s66
    %p70 = pneg %p64
    %p71 = scmp.eq.s32.totalorder %s8, 1
    %p72 = por %p70, %p71
    %p73 = scmp.ne.s32.totalorder %s65, %s68
    %p74 = scmp.eq.s32.totalorder %s8, 0
    %p75 = por %p73, %p74
    %p76 = scmp.ne.s32.totalorder %s65, %s68
    %p77 = scmp.eq.s32.totalorder %s13, 1
    %p78 = por %p76, %p77
    %p79 = scmp.ne.s32.totalorder %s68, %s69
    %p80 = scmp.eq.s32.totalorder %s13, 0
    %p81 = por %p79, %p80
    %p82 = scmp.ne.s32.totalorder %s68, %s69
    %p83 = scmp.eq.s32.totalorder %s14, 1
    %p84 = por %p82, %p83
    %p86 = scmp.ne.s32.totalorder %s69, %s85
    %p87 = scmp.eq.s32.totalorder %s14, 0
    %p88 = por %p86, %p87
    %p89 = scmp.le.s32.totalorder 1, %s8
    %p90 = scmp.lt.s32.totalorder %s8, 3
    %p91 = pnand %p89, %p90
    %p92 = pneg %p91
    // Predicated region
    $region9: #{siren_render_cm.1} parent=5 // pred_check
      _
    $region10: #{siren_render_cm.1} parent=5 // pred_check_branch
      %94 = sbr.rel (%p91) target = $region12
    $region11: #{siren_render_cm.1} parent=5 // pred_region
      %s95 = ssub.s32 %s8, 1
      // Predicated region
      $region13: #{siren_render_cm.1} parent=11 // pred_check
        %p96 = pneg %p55
      $region14: #{siren_render_cm.1} parent=11 // pred_check_branch
        %98 = sbr.rel (%p96) target = $region16
      $region15: #{siren_render_cm.1} parent=11 // pred_region
        _
      $region16: #{siren_render_cm.1} parent=11 // pred_fallthru
        _
    $region12: #{siren_render_cm.1} parent=5 // pred_fallthru
      _
    %p99 = scmp.lt.s32.totalorder %s8, 2
    // Predicated region
    $region17: #{siren_render_cm.1} parent=5 // pred_check
      %p100 = pneg %p99
    $region18: #{siren_render_cm.1} parent=5 // pred_check_branch
      %102 = sbr.rel (%p100) target = $region20
    $region19: #{siren_render_cm.1} parent=5 // pred_region
      // Predicated region
      $region21: #{siren_render_cm.1} parent=19 // pred_check
        %p103 = pneg %p28
      $region22: #{siren_render_cm.1} parent=19 // pred_check_branch
        %105 = sbr.rel (%p103) target = $region24
      $region23: #{siren_render_cm.1} parent=19 // pred_region
        %p106 = scmp.lt.s32.totalorder %s8, 1
        %s107 = scalar_select %p106, %s8, 1
        %s108 = smul.addr %s107, 2
        %s109 = scalar_lea.vmem %s0, %s108
      $region24: #{siren_render_cm.1} parent=19 // pred_fallthru
        _
    $region20: #{siren_render_cm.1} parent=5 // pred_fallthru
      _
    %p110 = scmp.le.s32.totalorder 1, %s8
    %p111 = scmp.lt.s32.totalorder %s8, 3
    %p112 = pnand %p110, %p111
    %p113 = pneg %p112
    // Predicated region
    $region25: #{siren_render_cm.1} parent=5 // pred_check
      _
    $region26: #{siren_render_cm.1} parent=5 // pred_check_branch
      %115 = sbr.rel (%p112) target = $region28
    $region27: #{siren_render_cm.1} parent=5 // pred_region
      %s116 = ssub.s32 %s8, 1
      %p117 = scmp.lt.s32.totalorder %s13, 1
      %s118 = scalar_select %p117, %s13, 1
      %s119 = smul.addr %s118, 2
      %s120 = scalar_lea.vmem %s0, %s119
      %p121 = pneg %p34
      %p122 = pneg %p31
      %p123 = pneg %p55
      %p124 = pneg %p52
      %p125 = pneg %p81
      %p126 = pneg %p78
      %p127 = scmp.lt.s32.totalorder %s13, 1
      %s128 = scalar_select %p127, %s13, 1
      %s129 = smul.addr %s128, 4
      %s130 = scalar_lea.vmem %s2, %s129
      %p131 = scmp.lt.s32.totalorder %s13, 1
      %s132 = scalar_select %p131, %s13, 1
      %s133 = smul.addr %s132, 2
      %s134 = scalar_lea.vmem %s0, %s133
      %p135 = scmp.lt.s32.totalorder %s13, 1
      %s136 = scalar_select %p135, %s13, 1
      %s137 = smul.addr %s136, 4
      %s138 = scalar_lea.vmem %s2, %s137
      %v139 = vld [vmem:[%s1] sm:$0xff]
      %v140 = vld [vmem:[%s1 + $0x8] sm:$0xff]
      %v141 = vld [vmem:[%s1 + $0x10] sm:$0xff]
      %v142 = vld [vmem:[%s1 + $0x18] sm:$0xff]
      %144 = vset.pattern.permute.xlu0 32
      %145 = vperm.xlu0 %144, %v139
      %v146 = vpop.permute.xlu0 %145
      %149 = vset.pattern.permute.xlu0 32
      %150 = vperm.xlu0 %149, %v140
      %v151 = vpop.permute.xlu0 %150
      %154 = vset.pattern.permute.xlu0 32
      %155 = vperm.xlu0 %154, %v141
      %v156 = vpop.permute.xlu0 %155
      %159 = vset.pattern.permute.xlu0 32
      %160 = vperm.xlu0 %159, %v142
      %v161 = vpop.permute.xlu0 %160
      %v163 = vld [vmem:[%s134] sm:$0x1]
      %164 = vset.pattern.permute.xlu0 0
      %165 = vperm.xlu0 %164, %v139
      %v166 = vpop.permute.xlu0 %165
      %168 = vset.pattern.permute.xlu0 0
      %169 = vperm.xlu0 %168, %v140
      %v170 = vpop.permute.xlu0 %169
      %172 = vset.pattern.permute.xlu0 0
      %173 = vperm.xlu0 %172, %v141
      %v174 = vpop.permute.xlu0 %173
      %176 = vset.pattern.permute.xlu0 0
      %177 = vperm.xlu0 %176, %v142
      %v178 = vpop.permute.xlu0 %177
      %v180 = vlaneseq
      %v181 = vshrl.u32 %v180, 7
      %v182 = vsub.s32 0, %v181
      %v183 = vrot.slane %v163, %v182
      %v184 = vmul.f32 %v166, %v183
      %v185 = vmul.f32 %v170, %v183
      %v186 = vmul.f32 %v174, %v183
      %v187 = vmul.f32 %v178, %v183
      %v188 = vadd.f32 %v146, %v184
      %v189 = vadd.f32 %v151, %v185
      %v190 = vadd.f32 %v156, %v186
      %v191 = vadd.f32 %v161, %v187
      %v192 = vld [vmem:[%s134 + $0x1] sm:$0x1]
      %193 = vset.pattern.permute.xlu0 1
      %194 = vperm.xlu0 %193, %v139
      %v195 = vpop.permute.xlu0 %194
      %197 = vset.pattern.permute.xlu0 1
      %198 = vperm.xlu0 %197, %v140
      %v199 = vpop.permute.xlu0 %198
      %201 = vset.pattern.permute.xlu0 1
      %202 = vperm.xlu0 %201, %v141
      %v203 = vpop.permute.xlu0 %202
      %205 = vset.pattern.permute.xlu0 1
      %206 = vperm.xlu0 %205, %v142
      %v207 = vpop.permute.xlu0 %206
      %v209 = vlaneseq
      %v210 = vshrl.u32 %v209, 7
      %v211 = vsub.s32 0, %v210
      %v212 = vrot.slane %v192, %v211
      %v213 = vmul.f32 %v195, %v212
      %v214 = vmul.f32 %v199, %v212
      %v215 = vmul.f32 %v203, %v212
      %v216 = vmul.f32 %v207, %v212
      %v217 = vadd.f32 %v188, %v213
      %v218 = vadd.f32 %v189, %v214
      %v219 = vadd.f32 %v190, %v215
      %v220 = vadd.f32 %v191, %v216
      %v221 = vand.u32 2147483647, %v217
      %vm222 = vcmp.le.f32.partialorder %v221, 0.7853982
      %vm223 = vcmp.lt.s32.totalorder %v217, 0
      %v224 = vand.u32 %v217, 2139095040
      %v225 = vshrl.u32 %v224, 23
      %v226 = vsub.s32 %v225, 127
      %v227 = vand.u32 2147483647, %v217
      %v228 = vand.u32 %v227, 8388607
      %v229 = vor.u32 %v228, 8388608
      %v230 = vsub.s32 0, %v229
      %v231 = vadd.s32 %v226, 1
      %vm232 = vcmp.gt.s32.totalorder %v231, 0
      %v233 = vsel %vm232, %v231, 0
      %v234 = vshrl.u32 %v233, 5
      %v235 = vand.u32 %v233, 31
      %v236 = vsub.s32 32, %v235
      %v237 = vshrl.u32 683565275, %v236
      %v238 = vshll.u32 683565275, %v235
      %v239 = vshrl.u32 2475754826, %v236
      %v240 = vor.u32 %v238, %v239
      %v241 = vshll.u32 2475754826, %v235
      %v242 = vshrl.u32 2131351028, %v236
      %v243 = vor.u32 %v241, %v242
      %v244 = vshll.u32 2131351028, %v235
      %v245 = vshrl.u32 2102212464, %v236
      %v246 = vor.u32 %v244, %v245
      %v247 = vshll.u32 2102212464, %v235
      %v248 = vshrl.u32 920167782, %v236
      %v249 = vor.u32 %v247, %v248
      %v250 = vshll.u32 920167782, %v235
      %v251 = vshrl.u32 1326507024, %v236
      %v252 = vor.u32 %v250, %v251
      %vm253 = vcmp.lt.s32.totalorder %v234, 1
      %vm254 = vcmp.lt.s32.totalorder %v234, 2
      %vm255 = vcmp.lt.s32.totalorder %v234, 3
      %vm256 = vcmp.lt.s32.totalorder %v234, 4
      %v257 = vsel %vm253, %v237, %v240
      %v258 = vsel %vm256, %v246, 2102212464
      %v259 = vsel %vm255, %v243, %v258
      %v260 = vsel %vm254, %v257, %v259
      %v261 = vsel %vm253, %v240, %v243
      %v262 = vsel %vm256, %v249, 920167782
      %v263 = vsel %vm255, %v246, %v262
      %v264 = vsel %vm254, %v261, %v263
      %v265 = vsel %vm253, %v243, %v246
      %v266 = vsel %vm256, %v252, 1326507024
      %v267 = vsel %vm255, %v249, %v266
      %v268 = vsel %vm254, %v265, %v267
      %v269 = vshll.u32 %v229, 8
      %v270 = vmul.u32.u64.compose %v269, %v268
      %v271 = vextract.low.u32 %v270
      %v272 = vextract.high.u32 %v270
      %v273 = vmul.u32.u64.compose %v269, %v264
      %v274 = vextract.low.u32 %v273
      %v275 = vextract.high.u32 %v273
      %v276 = vmul.u32 %v269, %v260
      %v277 = vadd.s32 %v272, %v274
      %vm278 = vc.u32 %v272, %v274
      %v279 = vadd.s32 %v275, 1
      %v280 = vsel %vm278, %v279, %v275
      %v281 = vadd.s32 %v276, %v280
      %v282 = vadd.s32 %v281, 536870912
      %v283 = vshrl.u32 %v282, 30
      %v284 = vshll.u32 %v283, 30
      %v285 = vsub.s32 %v281, %v284
      %vm286 = vcmp.lt.s32.totalorder %v285, 0
      %v287 = vsub.s32 0, %v285
      %v288 = vsel %vm286, %v287, %v285
      %v289 = vclz %v288
      %v290 = vsub.s32 %v289, 2
      %vm291 = vcmp.gt.s32.totalorder 0, %v290
      %v292 = vsel %vm291, 0, %v290
      %v293 = vsub.s32 32, %v292
      %v294 = vshll.u32 %v285, %v292
      %v295 = vshrl.u32 %v277, %v293
      %v296 = vor.u32 %v294, %v295
      %v297 = vsub.s32 4294967266, %v292
      %v298 = vadd.s32 %v297, 127
      %v299 = vshll.u32 %v298, 23
      %v300 = vor.u32 4788187, %v299
      %v301 = vand.u32 2147483647, %v300
      %v303 = vcvt.s32.f32 %v296
      %v304 = vmul.f32 %v303, %v301
      %v305 = vxor.u32 %v304, 2147483648
      %v306 = vsel %vm223, %v305, %v304
      %v307 = vsub.s32 4, %v283
      %v308 = vsel %vm223, %v307, %v283
      %v309 = vsel %vm222, %v217, %v306
      %v310 = vsel %vm222, 0, %v308
      %v311 = vcosq.f32.pop %v309
      %v312 = vsinq.f32.pop %v309
      %vm313 = vweird.f32 %v217
      %v314 = vadd.s32 %v310, 3
      %v315 = vand.u32 %v314, 3
      %vm316 = vcmp.lt.s32.totalorder %v315, 2
      %vm317 = vcmp.eq.s32.totalorder %v315, 0
      %v318 = vxor.u32 %v312, 2147483648
      %v319 = vsel %vm317, %v311, %v318
      %vm320 = vcmp.eq.s32.totalorder %v315, 2
      %v321 = vxor.u32 %v311, 2147483648
      %v322 = vsel %vm320, %v321, %v312
      %v323 = vsel %vm316, %v319, %v322
      %v324 = vsel %vm313, nan, %v323
      %v325 = vand.u32 2147483647, %v218
      %vm326 = vcmp.le.f32.partialorder %v325, 0.7853982
      %vm327 = vcmp.lt.s32.totalorder %v218, 0
      %v328 = vand.u32 %v218, 2139095040
      %v329 = vshrl.u32 %v328, 23
      %v330 = vsub.s32 %v329, 127
      %v331 = vand.u32 2147483647, %v218
      %v332 = vand.u32 %v331, 8388607
      %v333 = vor.u32 %v332, 8388608
      %v334 = vsub.s32 0, %v333
      %v335 = vadd.s32 %v330, 1
      %vm336 = vcmp.gt.s32.totalorder %v335, 0
      %v337 = vsel %vm336, %v335, 0
      %v338 = vshrl.u32 %v337, 5
      %v339 = vand.u32 %v337, 31
      %v340 = vsub.s32 32, %v339
      %v341 = vshrl.u32 683565275, %v340
      %v342 = vshll.u32 683565275, %v339
      %v343 = vshrl.u32 2475754826, %v340
      %v344 = vor.u32 %v342, %v343
      %v345 = vshll.u32 2475754826, %v339
      %v346 = vshrl.u32 2131351028, %v340
      %v347 = vor.u32 %v345, %v346
      %v348 = vshll.u32 2131351028, %v339
      %v349 = vshrl.u32 2102212464, %v340
      %v350 = vor.u32 %v348, %v349
      %v351 = vshll.u32 2102212464, %v339
      %v352 = vshrl.u32 920167782, %v340
      %v353 = vor.u32 %v351, %v352
      %v354 = vshll.u32 920167782, %v339
      %v355 = vshrl.u32 1326507024, %v340
      %v356 = vor.u32 %v354, %v355
      %vm357 = vcmp.lt.s32.totalorder %v338, 1
      %vm358 = vcmp.lt.s32.totalorder %v338, 2
      %vm359 = vcmp.lt.s32.totalorder %v338, 3
      %vm360 = vcmp.lt.s32.totalorder %v338, 4
      %v361 = vsel %vm357, %v341, %v344
      %v362 = vsel %vm360, %v350, 2102212464
      %v363 = vsel %vm359, %v347, %v362
      %v364 = vsel %vm358, %v361, %v363
      %v365 = vsel %vm357, %v344, %v347
      %v366 = vsel %vm360, %v353, 920167782
      %v367 = vsel %vm359, %v350, %v366
      %v368 = vsel %vm358, %v365, %v367
      %v369 = vsel %vm357, %v347, %v350
      %v370 = vsel %vm360, %v356, 1326507024
      %v371 = vsel %vm359, %v353, %v370
      %v372 = vsel %vm358, %v369, %v371
      %v373 = vshll.u32 %v333, 8
      %v374 = vmul.u32.u64.compose %v373, %v372
      %v375 = vextract.low.u32 %v374
      %v376 = vextract.high.u32 %v374
      %v377 = vmul.u32.u64.compose %v373, %v368
      %v378 = vextract.low.u32 %v377
      %v379 = vextract.high.u32 %v377
      %v380 = vmul.u32 %v373, %v364
      %v381 = vadd.s32 %v376, %v378
      %vm382 = vc.u32 %v376, %v378
      %v383 = vadd.s32 %v379, 1
      %v384 = vsel %vm382, %v383, %v379
      %v385 = vadd.s32 %v380, %v384
      %v386 = vadd.s32 %v385, 536870912
      %v387 = vshrl.u32 %v386, 30
      %v388 = vshll.u32 %v387, 30
      %v389 = vsub.s32 %v385, %v388
      %vm390 = vcmp.lt.s32.totalorder %v389, 0
      %v391 = vsub.s32 0, %v389
      %v392 = vsel %vm390, %v391, %v389
      %v393 = vclz %v392
      %v394 = vsub.s32 %v393, 2
      %vm395 = vcmp.gt.s32.totalorder 0, %v394
      %v396 = vsel %vm395, 0, %v394
      %v397 = vsub.s32 32, %v396
      %v398 = vshll.u32 %v389, %v396
      %v399 = vshrl.u32 %v381, %v397
      %v400 = vor.u32 %v398, %v399
      %v401 = vsub.s32 4294967266, %v396
      %v402 = vadd.s32 %v401, 127
      %v403 = vshll.u32 %v402, 23
      %v404 = vor.u32 4788187, %v403
      %v405 = vand.u32 2147483647, %v404
      %v407 = vcvt.s32.f32 %v400
      %v408 = vmul.f32 %v407, %v405
      %v409 = vxor.u32 %v408, 2147483648
      %v410 = vsel %vm327, %v409, %v408
      %v411 = vsub.s32 4, %v387
      %v412 = vsel %vm327, %v411, %v387
      %v413 = vsel %vm326, %v218, %v410
      %v414 = vsel %vm326, 0, %v412
      %v415 = vcosq.f32.pop %v413
      %v416 = vsinq.f32.pop %v413
      %vm417 = vweird.f32 %v218
      %v418 = vadd.s32 %v414, 3
      %v419 = vand.u32 %v418, 3
      %vm420 = vcmp.lt.s32.totalorder %v419, 2
      %vm421 = vcmp.eq.s32.totalorder %v419, 0
      %v422 = vxor.u32 %v416, 2147483648
      %v423 = vsel %vm421, %v415, %v422
      %vm424 = vcmp.eq.s32.totalorder %v419, 2
      %v425 = vxor.u32 %v415, 2147483648
      %v426 = vsel %vm424, %v425, %v416
      %v427 = vsel %vm420, %v423, %v426
      %v428 = vsel %vm417, nan, %v427
      %v429 = vand.u32 2147483647, %v219
      %vm430 = vcmp.le.f32.partialorder %v429, 0.7853982
      %vm431 = vcmp.lt.s32.totalorder %v219, 0
      %v432 = vand.u32 %v219, 2139095040
      %v433 = vshrl.u32 %v432, 23
      %v434 = vsub.s32 %v433, 127
      %v435 = vand.u32 2147483647, %v219
      %v436 = vand.u32 %v435, 8388607
      %v437 = vor.u32 %v436, 8388608
      %v438 = vsub.s32 0, %v437
      %v439 = vadd.s32 %v434, 1
      %vm440 = vcmp.gt.s32.totalorder %v439, 0
      %v441 = vsel %vm440, %v439, 0
      %v442 = vshrl.u32 %v441, 5
      %v443 = vand.u32 %v441, 31
      %v444 = vsub.s32 32, %v443
      %v445 = vshrl.u32 683565275, %v444
      %v446 = vshll.u32 683565275, %v443
      %v447 = vshrl.u32 2475754826, %v444
      %v448 = vor.u32 %v446, %v447
      %v449 = vshll.u32 2475754826, %v443
      %v450 = vshrl.u32 2131351028, %v444
      %v451 = vor.u32 %v449, %v450
      %v452 = vshll.u32 2131351028, %v443
      %v453 = vshrl.u32 2102212464, %v444
      %v454 = vor.u32 %v452, %v453
      %v455 = vshll.u32 2102212464, %v443
      %v456 = vshrl.u32 920167782, %v444
      %v457 = vor.u32 %v455, %v456
      %v458 = vshll.u32 920167782, %v443
      %v459 = vshrl.u32 1326507024, %v444
      %v460 = vor.u32 %v458, %v459
      %vm461 = vcmp.lt.s32.totalorder %v442, 1
      %vm462 = vcmp.lt.s32.totalorder %v442, 2
      %vm463 = vcmp.lt.s32.totalorder %v442, 3
      %vm464 = vcmp.lt.s32.totalorder %v442, 4
      %v465 = vsel %vm461, %v445, %v448
      %v466 = vsel %vm464, %v454, 2102212464
      %v467 = vsel %vm463, %v451, %v466
      %v468 = vsel %vm462, %v465, %v467
      %v469 = vsel %vm461, %v448, %v451
      %v470 = vsel %vm464, %v457, 920167782
      %v471 = vsel %vm463, %v454, %v470
      %v472 = vsel %vm462, %v469, %v471
      %v473 = vsel %vm461, %v451, %v454
      %v474 = vsel %vm464, %v460, 1326507024
      %v475 = vsel %vm463, %v457, %v474
      %v476 = vsel %vm462, %v473, %v475
      %v477 = vshll.u32 %v437, 8
      %v478 = vmul.u32.u64.compose %v477, %v476
      %v479 = vextract.low.u32 %v478
      %v480 = vextract.high.u32 %v478
      %v481 = vmul.u32.u64.compose %v477, %v472
      %v482 = vextract.low.u32 %v481
      %v483 = vextract.high.u32 %v481
      %v484 = vmul.u32 %v477, %v468
      %v485 = vadd.s32 %v480, %v482
      %vm486 = vc.u32 %v480, %v482
      %v487 = vadd.s32 %v483, 1
      %v488 = vsel %vm486, %v487, %v483
      %v489 = vadd.s32 %v484, %v488
      %v490 = vadd.s32 %v489, 536870912
      %v491 = vshrl.u32 %v490, 30
      %v492 = vshll.u32 %v491, 30
      %v493 = vsub.s32 %v489, %v492
      %vm494 = vcmp.lt.s32.totalorder %v493, 0
      %v495 = vsub.s32 0, %v493
      %v496 = vsel %vm494, %v495, %v493
      %v497 = vclz %v496
      %v498 = vsub.s32 %v497, 2
      %vm499 = vcmp.gt.s32.totalorder 0, %v498
      %v500 = vsel %vm499, 0, %v498
      %v501 = vsub.s32 32, %v500
      %v502 = vshll.u32 %v493, %v500
      %v503 = vshrl.u32 %v485, %v501
      %v504 = vor.u32 %v502, %v503
      %v505 = vsub.s32 4294967266, %v500
      %v506 = vadd.s32 %v505, 127
      %v507 = vshll.u32 %v506, 23
      %v508 = vor.u32 4788187, %v507
      %v509 = vand.u32 2147483647, %v508
      %v511 = vcvt.s32.f32 %v504
      %v512 = vmul.f32 %v511, %v509
      %v513 = vxor.u32 %v512, 2147483648
      %v514 = vsel %vm431, %v513, %v512
      %v515 = vsub.s32 4, %v491
      %v516 = vsel %vm431, %v515, %v491
      %v517 = vsel %vm430, %v219, %v514
      %v518 = vsel %vm430, 0, %v516
      %v519 = vcosq.f32.pop %v517
      %v520 = vsinq.f32.pop %v517
      %vm521 = vweird.f32 %v219
      %v522 = vadd.s32 %v518, 3
      %v523 = vand.u32 %v522, 3
      %vm524 = vcmp.lt.s32.totalorder %v523, 2
      %vm525 = vcmp.eq.s32.totalorder %v523, 0
      %v526 = vxor.u32 %v520, 2147483648
      %v527 = vsel %vm525, %v519, %v526
      %vm528 = vcmp.eq.s32.totalorder %v523, 2
      %v529 = vxor.u32 %v519, 2147483648
      %v530 = vsel %vm528, %v529, %v520
      %v531 = vsel %vm524, %v527, %v530
      %v532 = vsel %vm521, nan, %v531
      %v533 = vand.u32 2147483647, %v220
      %vm534 = vcmp.le.f32.partialorder %v533, 0.7853982
      %vm535 = vcmp.lt.s32.totalorder %v220, 0
      %v536 = vand.u32 %v220, 2139095040
      %v537 = vshrl.u32 %v536, 23
      %v538 = vsub.s32 %v537, 127
      %v539 = vand.u32 2147483647, %v220
      %v540 = vand.u32 %v539, 8388607
      %v541 = vor.u32 %v540, 8388608
      %v542 = vsub.s32 0, %v541
      %v543 = vadd.s32 %v538, 1
      %vm544 = vcmp.gt.s32.totalorder %v543, 0
      %v545 = vsel %vm544, %v543, 0
      %v546 = vshrl.u32 %v545, 5
      %v547 = vand.u32 %v545, 31
      %v548 = vsub.s32 32, %v547
      %v549 = vshrl.u32 683565275, %v548
      %v550 = vshll.u32 683565275, %v547
      %v551 = vshrl.u32 2475754826, %v548
      %v552 = vor.u32 %v550, %v551
      %v553 = vshll.u32 2475754826, %v547
      %v554 = vshrl.u32 2131351028, %v548
      %v555 = vor.u32 %v553, %v554
      %v556 = vshll.u32 2131351028, %v547
      %v557 = vshrl.u32 2102212464, %v548
      %v558 = vor.u32 %v556, %v557
      %v559 = vshll.u32 2102212464, %v547
      %v560 = vshrl.u32 920167782, %v548
      %v561 = vor.u32 %v559, %v560
      %v562 = vshll.u32 920167782, %v547
      %v563 = vshrl.u32 1326507024, %v548
      %v564 = vor.u32 %v562, %v563
      %vm565 = vcmp.lt.s32.totalorder %v546, 1
      %vm566 = vcmp.lt.s32.totalorder %v546, 2
      %vm567 = vcmp.lt.s32.totalorder %v546, 3
      %vm568 = vcmp.lt.s32.totalorder %v546, 4
      %v569 = vsel %vm565, %v549, %v552
      %v570 = vsel %vm568, %v558, 2102212464
      %v571 = vsel %vm567, %v555, %v570
      %v572 = vsel %vm566, %v569, %v571
      %v573 = vsel %vm565, %v552, %v555
      %v574 = vsel %vm568, %v561, 920167782
      %v575 = vsel %vm567, %v558, %v574
      %v576 = vsel %vm566, %v573, %v575
      %v577 = vsel %vm565, %v555, %v558
      %v578 = vsel %vm568, %v564, 1326507024
      %v579 = vsel %vm567, %v561, %v578
      %v580 = vsel %vm566, %v577, %v579
      %v581 = vshll.u32 %v541, 8
      %v582 = vmul.u32.u64.compose %v581, %v580
      %v583 = vextract.low.u32 %v582
      %v584 = vextract.high.u32 %v582
      %v585 = vmul.u32.u64.compose %v581, %v576
      %v586 = vextract.low.u32 %v585
      %v587 = vextract.high.u32 %v585
      %v588 = vmul.u32 %v581, %v572
      %v589 = vadd.s32 %v584, %v586
      %vm590 = vc.u32 %v584, %v586
      %v591 = vadd.s32 %v587, 1
      %v592 = vsel %vm590, %v591, %v587
      %v593 = vadd.s32 %v588, %v592
      %v594 = vadd.s32 %v593, 536870912
      %v595 = vshrl.u32 %v594, 30
      %v596 = vshll.u32 %v595, 30
      %v597 = vsub.s32 %v593, %v596
      %vm598 = vcmp.lt.s32.totalorder %v597, 0
      %v599 = vsub.s32 0, %v597
      %v600 = vsel %vm598, %v599, %v597
      %v601 = vclz %v600
      %v602 = vsub.s32 %v601, 2
      %vm603 = vcmp.gt.s32.totalorder 0, %v602
      %v604 = vsel %vm603, 0, %v602
      %v605 = vsub.s32 32, %v604
      %v606 = vshll.u32 %v597, %v604
      %v607 = vshrl.u32 %v589, %v605
      %v608 = vor.u32 %v606, %v607
      %v609 = vsub.s32 4294967266, %v604
      %v610 = vadd.s32 %v609, 127
      %v611 = vshll.u32 %v610, 23
      %v612 = vor.u32 4788187, %v611
      %v613 = vand.u32 2147483647, %v612
      %v615 = vcvt.s32.f32 %v608
      %v616 = vmul.f32 %v615, %v613
      %v617 = vxor.u32 %v616, 2147483648
      %v618 = vsel %vm535, %v617, %v616
      %v619 = vsub.s32 4, %v595
      %v620 = vsel %vm535, %v619, %v595
      %v621 = vsel %vm534, %v220, %v618
      %v622 = vsel %vm534, 0, %v620
      %v623 = vcosq.f32.pop %v621
      %v624 = vsinq.f32.pop %v621
      %vm625 = vweird.f32 %v220
      %v626 = vadd.s32 %v622, 3
      %v627 = vand.u32 %v626, 3
      %vm628 = vcmp.lt.s32.totalorder %v627, 2
      %vm629 = vcmp.eq.s32.totalorder %v627, 0
      %v630 = vxor.u32 %v624, 2147483648
      %v631 = vsel %vm629, %v623, %v630
      %vm632 = vcmp.eq.s32.totalorder %v627, 2
      %v633 = vxor.u32 %v623, 2147483648
      %v634 = vsel %vm632, %v633, %v624
      %v635 = vsel %vm628, %v631, %v634
      %v636 = vsel %vm625, nan, %v635
      %v637 = vld [vmem:[%s1 + $0x20] sm:$0xff]
      %v638 = vld [vmem:[%s1 + $0x28] sm:$0xff]
      %v639 = vld [vmem:[%s1 + $0x30] sm:$0xff]
      %v640 = vld [vmem:[%s1 + $0x38] sm:$0xff]
      %642 = vset.pattern.permute.xlu0 32
      %643 = vperm.xlu0 %642, %v637
      %v644 = vpop.permute.xlu0 %643
      %647 = vset.pattern.permute.xlu0 32
      %648 = vperm.xlu0 %647, %v638
      %v649 = vpop.permute.xlu0 %648
      %652 = vset.pattern.permute.xlu0 32
      %653 = vperm.xlu0 %652, %v639
      %v654 = vpop.permute.xlu0 %653
      %657 = vset.pattern.permute.xlu0 32
      %658 = vperm.xlu0 %657, %v640
      %v659 = vpop.permute.xlu0 %658
      %vm661 = vcmask 261120
      %v662 = vsel %vm661, %v637, 0
      %v664 = vsel %vm661, %v638, 0
      %v666 = vsel %vm661, %v639, 0
      %v668 = vsel %vm661, %v640, 0
      %670 = vmatprep.subr.mxu0 0.0
      %671 = vmatpush1.msra.mxu0 %v324
      %672 = vmatprep.subr.mxu0 0.0
      %673 = vmatpush1.msra.mxu0 %v428
      %674 = vmatprep.subr.mxu0 0.0
      %675 = vmatpush1.msra.mxu0 %v532
      %676 = vmatprep.subr.mxu0 0.0
      %677 = vmatpush1.msra.mxu0 %v636
      %678 = vmatprep.subr.mxu0 0.0
      %679 = vmatpush1.msra.mxu0 0.0
      %680 = vmatprep.subr.mxu0 0.0
      %681 = vmatpush1.msra.mxu0 0.0
      %682 = vmatprep.subr.mxu0 0.0
      %683 = vmatpush1.msra.mxu0 0.0
      %684 = vmatprep.subr.mxu0 0.0
      %685 = vmatpush1.msra.mxu0 0.0
      %686 = vmatprep.subr.mxu0 0.0
      %687 = vmatpush1.msra.mxu0 0.0
      %688 = vmatprep.subr.mxu0 0.0
      %689 = vmatpush1.msra.mxu0 0.0
      %690 = vmatprep.subr.mxu0 0.0
      %691 = vmatpush1.msra.mxu0 0.0
      %692 = vmatprep.subr.mxu0 0.0
      %693 = vmatpush1.msra.mxu0 0.0
      %694 = vmatprep.subr.mxu0 0.0
      %695 = vmatpush1.msra.mxu0 0.0
      %696 = vmatprep.subr.mxu0 0.0
      %697 = vmatpush1.msra.mxu0 0.0
      %698 = vmatprep.subr.mxu0 0.0
      %699 = vmatpush1.msra.mxu0 0.0
      %700 = vmatprep.subr.mxu0 0.0
      %701 = vmatpush1.msra.mxu0 0.0
      %702 = vmatprep.subr.mxu0 0.0
      %703 = vmatpush1.msra.mxu0 0.0
      %704 = vmatprep.subr.mxu0 0.0
      %705 = vmatpush1.msra.mxu0 0.0
      %706 = vmatprep.subr.mxu0 0.0
      %707 = vmatpush1.msra.mxu0 0.0
      %708 = vmatprep.subr.mxu0 0.0
      %709 = vmatpush1.msra.mxu0 0.0
      %710 = vmatprep.subr.mxu0 0.0
      %711 = vmatpush1.msra.mxu0 0.0
      %712 = vmatprep.subr.mxu0 0.0
      %713 = vmatpush1.msra.mxu0 0.0
      %714 = vmatprep.subr.mxu0 0.0
      %715 = vmatpush1.msra.mxu0 0.0
      %716 = vmatprep.subr.mxu0 0.0
      %717 = vmatpush1.msra.mxu0 0.0
      %718 = vmatprep.subr.mxu0 0.0
      %719 = vmatpush1.msra.mxu0 0.0
      %720 = vmatprep.subr.mxu0 0.0
      %721 = vmatpush1.msra.mxu0 0.0
      %722 = vmatprep.subr.mxu0 0.0
      %723 = vmatpush1.msra.mxu0 0.0
      %724 = vmatprep.subr.mxu0 0.0
      %725 = vmatpush1.msra.mxu0 0.0
      %726 = vmatprep.subr.mxu0 0.0
      %727 = vmatpush1.msra.mxu0 0.0
      %728 = vmatprep.subr.mxu0 0.0
      %729 = vmatpush1.msra.mxu0 0.0
      %730 = vmatprep.subr.mxu0 0.0
      %731 = vmatpush1.msra.mxu0 0.0
      %732 = vmatprep.subr.mxu0 0.0
      %733 = vmatpush1.msra.mxu0 0.0
      %734 = vmatprep.mubr.f32.mxu0 0.0
      %735 = vmatmul.mubr.f32.gmra.mrb[0].mxu0 %v662
      %v736 = vpop.f32.mrb[0].mxu0
      %v737 = vadd.f32 %v644, %v736
      %v738 = vpop.f32.mrb[0].mxu0
      %739 = vmatprep.mubr.f32.mxu0 0.0
      %740 = vmatmul.mubr.f32.gmra.mrb[0].mxu0 %v664
      %v741 = vpop.f32.mrb[0].mxu0
      %v742 = vadd.f32 %v649, %v741
      %v743 = vpop.f32.mrb[0].mxu0
      %744 = vmatprep.mubr.f32.mxu0 0.0
      %745 = vmatmul.mubr.f32.gmra.mrb[0].mxu0 %v666
      %v746 = vpop.f32.mrb[0].mxu0
      %v747 = vadd.f32 %v654, %v746
      %v748 = vpop.f32.mrb[0].mxu0
      %749 = vmatprep.mubr.f32.mxu0 0.0
      %750 = vmatmul.mubr.f32.gmra.mrb[0].mxu0 %v668
      %v751 = vpop.f32.mrb[0].mxu0
      %v752 = vadd.f32 %v659, %v751
      %v753 = vpop.f32.mrb[0].mxu0
      %754 = vdwg.mxu0
      %v755 = vand.u32 2147483647, %v737
      %vm756 = vcmp.le.f32.partialorder %v755, 0.7853982
      %vm757 = vcmp.lt.s32.totalorder %v737, 0
      %v758 = vand.u32 %v737, 2139095040
      %v759 = vshrl.u32 %v758, 23
      %v760 = vsub.s32 %v759, 127
      %v761 = vand.u32 2147483647, %v737
      %v762 = vand.u32 %v761, 8388607
      %v763 = vor.u32 %v762, 8388608
      %v764 = vsub.s32 0, %v763
      %v765 = vadd.s32 %v760, 1
      %vm766 = vcmp.gt.s32.totalorder %v765, 0
      %v767 = vsel %vm766, %v765, 0
      %v768 = vshrl.u32 %v767, 5
      %v769 = vand.u32 %v767, 31
      %v770 = vsub.s32 32, %v769
      %v771 = vshrl.u32 683565275, %v770
      %v772 = vshll.u32 683565275, %v769
      %v773 = vshrl.u32 2475754826, %v770
      %v774 = vor.u32 %v772, %v773
      %v775 = vshll.u32 2475754826, %v769
      %v776 = vshrl.u32 2131351028, %v770
      %v777 = vor.u32 %v775, %v776
      %v778 = vshll.u32 2131351028, %v769
      %v779 = vshrl.u32 2102212464, %v770
      %v780 = vor.u32 %v778, %v779
      %v781 = vshll.u32 2102212464, %v769
      %v782 = vshrl.u32 920167782, %v770
      %v783 = vor.u32 %v781, %v782
      %v784 = vshll.u32 920167782, %v769
      %v785 = vshrl.u32 1326507024, %v770
      %v786 = vor.u32 %v784, %v785
      %vm787 = vcmp.lt.s32.totalorder %v768, 1
      %vm788 = vcmp.lt.s32.totalorder %v768, 2
      %vm789 = vcmp.lt.s32.totalorder %v768, 3
      %vm790 = vcmp.lt.s32.totalorder %v768, 4
      %v791 = vsel %vm787, %v771, %v774
      %v792 = vsel %vm790, %v780, 2102212464
      %v793 = vsel %vm789, %v777, %v792
      %v794 = vsel %vm788, %v791, %v793
      %v795 = vsel %vm787, %v774, %v777
      %v796 = vsel %vm790, %v783, 920167782
      %v797 = vsel %vm789, %v780, %v796
      %v798 = vsel %vm788, %v795, %v797
      %v799 = vsel %vm787, %v777, %v780
      %v800 = vsel %vm790, %v786, 1326507024
      %v801 = vsel %vm789, %v783, %v800
      %v802 = vsel %vm788, %v799, %v801
      %v803 = vshll.u32 %v763, 8
      %v804 = vmul.u32.u64.compose %v803, %v802
      %v805 = vextract.low.u32 %v804
      %v806 = vextract.high.u32 %v804
      %v807 = vmul.u32.u64.compose %v803, %v798
      %v808 = vextract.low.u32 %v807
      %v809 = vextract.high.u32 %v807
      %v810 = vmul.u32 %v803, %v794
      %v811 = vadd.s32 %v806, %v808
      %vm812 = vc.u32 %v806, %v808
      %v813 = vadd.s32 %v809, 1
      %v814 = vsel %vm812, %v813, %v809
      %v815 = vadd.s32 %v810, %v814
      %v816 = vadd.s32 %v815, 536870912
      %v817 = vshrl.u32 %v816, 30
      %v818 = vshll.u32 %v817, 30
      %v819 = vsub.s32 %v815, %v818
      %vm820 = vcmp.lt.s32.totalorder %v819, 0
      %v821 = vsub.s32 0, %v819
      %v822 = vsel %vm820, %v821, %v819
      %v823 = vclz %v822
      %v824 = vsub.s32 %v823, 2
      %vm825 = vcmp.gt.s32.totalorder 0, %v824
      %v826 = vsel %vm825, 0, %v824
      %v827 = vsub.s32 32, %v826
      %v828 = vshll.u32 %v819, %v826
      %v829 = vshrl.u32 %v811, %v827
      %v830 = vor.u32 %v828, %v829
      %v831 = vsub.s32 4294967266, %v826
      %v832 = vadd.s32 %v831, 127
      %v833 = vshll.u32 %v832, 23
      %v834 = vor.u32 4788187, %v833
      %v835 = vand.u32 2147483647, %v834
      %v837 = vcvt.s32.f32 %v830
      %v838 = vmul.f32 %v837, %v835
      %v839 = vxor.u32 %v838, 2147483648
      %v840 = vsel %vm757, %v839, %v838
      %v841 = vsub.s32 4, %v817
      %v842 = vsel %vm757, %v841, %v817
      %v843 = vsel %vm756, %v737, %v840
      %v844 = vsel %vm756, 0, %v842
      %v845 = vcosq.f32.pop %v843
      %v846 = vsinq.f32.pop %v843
      %vm847 = vweird.f32 %v737
      %v848 = vadd.s32 %v844, 3
      %v849 = vand.u32 %v848, 3
      %vm850 = vcmp.lt.s32.totalorder %v849, 2
      %vm851 = vcmp.eq.s32.totalorder %v849, 0
      %v852 = vxor.u32 %v846, 2147483648
      %v853 = vsel %vm851, %v845, %v852
      %vm854 = vcmp.eq.s32.totalorder %v849, 2
      %v855 = vxor.u32 %v845, 2147483648
      %v856 = vsel %vm854, %v855, %v846
      %v857 = vsel %vm850, %v853, %v856
      %v858 = vsel %vm847, nan, %v857
      %v859 = vand.u32 2147483647, %v742
      %vm860 = vcmp.le.f32.partialorder %v859, 0.7853982
      %vm861 = vcmp.lt.s32.totalorder %v742, 0
      %v862 = vand.u32 %v742, 2139095040
      %v863 = vshrl.u32 %v862, 23
      %v864 = vsub.s32 %v863, 127
      %v865 = vand.u32 2147483647, %v742
      %v866 = vand.u32 %v865, 8388607
      %v867 = vor.u32 %v866, 8388608
      %v868 = vsub.s32 0, %v867
      %v869 = vadd.s32 %v864, 1
      %vm870 = vcmp.gt.s32.totalorder %v869, 0
      %v871 = vsel %vm870, %v869, 0
      %v872 = vshrl.u32 %v871, 5
      %v873 = vand.u32 %v871, 31
      %v874 = vsub.s32 32, %v873
      %v875 = vshrl.u32 683565275, %v874
      %v876 = vshll.u32 683565275, %v873
      %v877 = vshrl.u32 2475754826, %v874
      %v878 = vor.u32 %v876, %v877
      %v879 = vshll.u32 2475754826, %v873
      %v880 = vshrl.u32 2131351028, %v874
      %v881 = vor.u32 %v879, %v880
      %v882 = vshll.u32 2131351028, %v873
      %v883 = vshrl.u32 2102212464, %v874
      %v884 = vor.u32 %v882, %v883
      %v885 = vshll.u32 2102212464, %v873
      %v886 = vshrl.u32 920167782, %v874
      %v887 = vor.u32 %v885, %v886
      %v888 = vshll.u32 920167782, %v873
      %v889 = vshrl.u32 1326507024, %v874
      %v890 = vor.u32 %v888, %v889
      %vm891 = vcmp.lt.s32.totalorder %v872, 1
      %vm892 = vcmp.lt.s32.totalorder %v872, 2
      %vm893 = vcmp.lt.s32.totalorder %v872, 3
      %vm894 = vcmp.lt.s32.totalorder %v872, 4
      %v895 = vsel %vm891, %v875, %v878
      %v896 = vsel %vm894, %v884, 2102212464
      %v897 = vsel %vm893, %v881, %v896
      %v898 = vsel %vm892, %v895, %v897
      %v899 = vsel %vm891, %v878, %v881
      %v900 = vsel %vm894, %v887, 920167782
      %v901 = vsel %vm893, %v884, %v900
      %v902 = vsel %vm892, %v899, %v901
      %v903 = vsel %vm891, %v881, %v884
      %v904 = vsel %vm894, %v890, 1326507024
      %v905 = vsel %vm893, %v887, %v904
      %v906 = vsel %vm892, %v903, %v905
      %v907 = vshll.u32 %v867, 8
      %v908 = vmul.u32.u64.compose %v907, %v906
      %v909 = vextract.low.u32 %v908
      %v910 = vextract.high.u32 %v908
      %v911 = vmul.u32.u64.compose %v907, %v902
      %v912 = vextract.low.u32 %v911
      %v913 = vextract.high.u32 %v911
      %v914 = vmul.u32 %v907, %v898
      %v915 = vadd.s32 %v910, %v912
      %vm916 = vc.u32 %v910, %v912
      %v917 = vadd.s32 %v913, 1
      %v918 = vsel %vm916, %v917, %v913
      %v919 = vadd.s32 %v914, %v918
      %v920 = vadd.s32 %v919, 536870912
      %v921 = vshrl.u32 %v920, 30
      %v922 = vshll.u32 %v921, 30
      %v923 = vsub.s32 %v919, %v922
      %vm924 = vcmp.lt.s32.totalorder %v923, 0
      %v925 = vsub.s32 0, %v923
      %v926 = vsel %vm924, %v925, %v923
      %v927 = vclz %v926
      %v928 = vsub.s32 %v927, 2
      %vm929 = vcmp.gt.s32.totalorder 0, %v928
      %v930 = vsel %vm929, 0, %v928
      %v931 = vsub.s32 32, %v930
      %v932 = vshll.u32 %v923, %v930
      %v933 = vshrl.u32 %v915, %v931
      %v934 = vor.u32 %v932, %v933
      %v935 = vsub.s32 4294967266, %v930
      %v936 = vadd.s32 %v935, 127
      %v937 = vshll.u32 %v936, 23
      %v938 = vor.u32 4788187, %v937
      %v939 = vand.u32 2147483647, %v938
      %v941 = vcvt.s32.f32 %v934
      %v942 = vmul.f32 %v941, %v939
      %v943 = vxor.u32 %v942, 2147483648
      %v944 = vsel %vm861, %v943, %v942
      %v945 = vsub.s32 4, %v921
      %v946 = vsel %vm861, %v945, %v921
      %v947 = vsel %vm860, %v742, %v944
      %v948 = vsel %vm860, 0, %v946
      %v949 = vcosq.f32.pop %v947
      %v950 = vsinq.f32.pop %v947
      %vm951 = vweird.f32 %v742
      %v952 = vadd.s32 %v948, 3
      %v953 = vand.u32 %v952, 3
      %vm954 = vcmp.lt.s32.totalorder %v953, 2
      %vm955 = vcmp.eq.s32.totalorder %v953, 0
      %v956 = vxor.u32 %v950, 2147483648
      %v957 = vsel %vm955, %v949, %v956
      %vm958 = vcmp.eq.s32.totalorder %v953, 2
      %v959 = vxor.u32 %v949, 2147483648
      %v960 = vsel %vm958, %v959, %v950
      %v961 = vsel %vm954, %v957, %v960
      %v962 = vsel %vm951, nan, %v961
      %v963 = vand.u32 2147483647, %v747
      %vm964 = vcmp.le.f32.partialorder %v963, 0.7853982
      %vm965 = vcmp.lt.s32.totalorder %v747, 0
      %v966 = vand.u32 %v747, 2139095040
      %v967 = vshrl.u32 %v966, 23
      %v968 = vsub.s32 %v967, 127
      %v969 = vand.u32 2147483647, %v747
      %v970 = vand.u32 %v969, 8388607
      %v971 = vor.u32 %v970, 8388608
      %v972 = vsub.s32 0, %v971
      %v973 = vadd.s32 %v968, 1
      %vm974 = vcmp.gt.s32.totalorder %v973, 0
      %v975 = vsel %vm974, %v973, 0
      %v976 = vshrl.u32 %v975, 5
      %v977 = vand.u32 %v975, 31
      %v978 = vsub.s32 32, %v977
      %v979 = vshrl.u32 683565275, %v978
      %v980 = vshll.u32 683565275, %v977
      %v981 = vshrl.u32 2475754826, %v978
      %v982 = vor.u32 %v980, %v981
      %v983 = vshll.u32 2475754826, %v977
      %v984 = vshrl.u32 2131351028, %v978
      %v985 = vor.u32 %v983, %v984
      %v986 = vshll.u32 2131351028, %v977
      %v987 = vshrl.u32 2102212464, %v978
      %v988 = vor.u32 %v986, %v987
      %v989 = vshll.u32 2102212464, %v977
      %v990 = vshrl.u32 920167782, %v978
      %v991 = vor.u32 %v989, %v990
      %v992 = vshll.u32 920167782, %v977
      %v993 = vshrl.u32 1326507024, %v978
      %v994 = vor.u32 %v992, %v993
      %vm995 = vcmp.lt.s32.totalorder %v976, 1
      %vm996 = vcmp.lt.s32.totalorder %v976, 2
      %vm997 = vcmp.lt.s32.totalorder %v976, 3
      %vm998 = vcmp.lt.s32.totalorder %v976, 4
      %v999 = vsel %vm995, %v979, %v982
      %v1000 = vsel %vm998, %v988, 2102212464
      %v1001 = vsel %vm997, %v985, %v1000
      %v1002 = vsel %vm996, %v999, %v1001
      %v1003 = vsel %vm995, %v982, %v985
      %v1004 = vsel %vm998, %v991, 920167782
      %v1005 = vsel %vm997, %v988, %v1004
      %v1006 = vsel %vm996, %v1003, %v1005
      %v1007 = vsel %vm995, %v985, %v988
      %v1008 = vsel %vm998, %v994, 1326507024
      %v1009 = vsel %vm997, %v991, %v1008
      %v1010 = vsel %vm996, %v1007, %v1009
      %v1011 = vshll.u32 %v971, 8
      %v1012 = vmul.u32.u64.compose %v1011, %v1010
      %v1013 = vextract.low.u32 %v1012
      %v1014 = vextract.high.u32 %v1012
      %v1015 = vmul.u32.u64.compose %v1011, %v1006
      %v1016 = vextract.low.u32 %v1015
      %v1017 = vextract.high.u32 %v1015
      %v1018 = vmul.u32 %v1011, %v1002
      %v1019 = vadd.s32 %v1014, %v1016
      %vm1020 = vc.u32 %v1014, %v1016
      %v1021 = vadd.s32 %v1017, 1
      %v1022 = vsel %vm1020, %v1021, %v1017
      %v1023 = vadd.s32 %v1018, %v1022
      %v1024 = vadd.s32 %v1023, 536870912
      %v1025 = vshrl.u32 %v1024, 30
      %v1026 = vshll.u32 %v1025, 30
      %v1027 = vsub.s32 %v1023, %v1026
      %vm1028 = vcmp.lt.s32.totalorder %v1027, 0
      %v1029 = vsub.s32 0, %v1027
      %v1030 = vsel %vm1028, %v1029, %v1027
      %v1031 = vclz %v1030
      %v1032 = vsub.s32 %v1031, 2
      %vm1033 = vcmp.gt.s32.totalorder 0, %v1032
      %v1034 = vsel %vm1033, 0, %v1032
      %v1035 = vsub.s32 32, %v1034
      %v1036 = vshll.u32 %v1027, %v1034
      %v1037 = vshrl.u32 %v1019, %v1035
      %v1038 = vor.u32 %v1036, %v1037
      %v1039 = vsub.s32 4294967266, %v1034
      %v1040 = vadd.s32 %v1039, 127
      %v1041 = vshll.u32 %v1040, 23
      %v1042 = vor.u32 4788187, %v1041
      %v1043 = vand.u32 2147483647, %v1042
      %v1045 = vcvt.s32.f32 %v1038
      %v1046 = vmul.f32 %v1045, %v1043
      %v1047 = vxor.u32 %v1046, 2147483648
      %v1048 = vsel %vm965, %v1047, %v1046
      %v1049 = vsub.s32 4, %v1025
      %v1050 = vsel %vm965, %v1049, %v1025
      %v1051 = vsel %vm964, %v747, %v1048
      %v1052 = vsel %vm964, 0, %v1050
      %v1053 = vcosq.f32.pop %v1051
      %v1054 = vsinq.f32.pop %v1051
      %vm1055 = vweird.f32 %v747
      %v1056 = vadd.s32 %v1052, 3
      %v1057 = vand.u32 %v1056, 3
      %vm1058 = vcmp.lt.s32.totalorder %v1057, 2
      %vm1059 = vcmp.eq.s32.totalorder %v1057, 0
      %v1060 = vxor.u32 %v1054, 2147483648
      %v1061 = vsel %vm1059, %v1053, %v1060
      %vm1062 = vcmp.eq.s32.totalorder %v1057, 2
      %v1063 = vxor.u32 %v1053, 2147483648
      %v1064 = vsel %vm1062, %v1063, %v1054
      %v1065 = vsel %vm1058, %v1061, %v1064
      %v1066 = vsel %vm1055, nan, %v1065
      %v1067 = vand.u32 2147483647, %v752
      %vm1068 = vcmp.le.f32.partialorder %v1067, 0.7853982
      %vm1069 = vcmp.lt.s32.totalorder %v752, 0
      %v1070 = vand.u32 %v752, 2139095040
      %v1071 = vshrl.u32 %v1070, 23
      %v1072 = vsub.s32 %v1071, 127
      %v1073 = vand.u32 2147483647, %v752
      %v1074 = vand.u32 %v1073, 8388607
      %v1075 = vor.u32 %v1074, 8388608
      %v1076 = vsub.s32 0, %v1075
      %v1077 = vadd.s32 %v1072, 1
      %vm1078 = vcmp.gt.s32.totalorder %v1077, 0
      %v1079 = vsel %vm1078, %v1077, 0
      %v1080 = vshrl.u32 %v1079, 5
      %v1081 = vand.u32 %v1079, 31
      %v1082 = vsub.s32 32, %v1081
      %v1083 = vshrl.u32 683565275, %v1082
      %v1084 = vshll.u32 683565275, %v1081
      %v1085 = vshrl.u32 2475754826, %v1082
      %v1086 = vor.u32 %v1084, %v1085
      %v1087 = vshll.u32 2475754826, %v1081
      %v1088 = vshrl.u32 2131351028, %v1082
      %v1089 = vor.u32 %v1087, %v1088
      %v1090 = vshll.u32 2131351028, %v1081
      %v1091 = vshrl.u32 2102212464, %v1082
      %v1092 = vor.u32 %v1090, %v1091
      %v1093 = vshll.u32 2102212464, %v1081
      %v1094 = vshrl.u32 920167782, %v1082
      %v1095 = vor.u32 %v1093, %v1094
      %v1096 = vshll.u32 920167782, %v1081
      %v1097 = vshrl.u32 1326507024, %v1082
      %v1098 = vor.u32 %v1096, %v1097
      %vm1099 = vcmp.lt.s32.totalorder %v1080, 1
      %vm1100 = vcmp.lt.s32.totalorder %v1080, 2
      %vm1101 = vcmp.lt.s32.totalorder %v1080, 3
      %vm1102 = vcmp.lt.s32.totalorder %v1080, 4
      %v1103 = vsel %vm1099, %v1083, %v1086
      %v1104 = vsel %vm1102, %v1092, 2102212464
      %v1105 = vsel %vm1101, %v1089, %v1104
      %v1106 = vsel %vm1100, %v1103, %v1105
      %v1107 = vsel %vm1099, %v1086, %v1089
      %v1108 = vsel %vm1102, %v1095, 920167782
      %v1109 = vsel %vm1101, %v1092, %v1108
      %v1110 = vsel %vm1100, %v1107, %v1109
      %v1111 = vsel %vm1099, %v1089, %v1092
      %v1112 = vsel %vm1102, %v1098, 1326507024
      %v1113 = vsel %vm1101, %v1095, %v1112
      %v1114 = vsel %vm1100, %v1111, %v1113
      %v1115 = vshll.u32 %v1075, 8
      %v1116 = vmul.u32.u64.compose %v1115, %v1114
      %v1117 = vextract.low.u32 %v1116
      %v1118 = vextract.high.u32 %v1116
      %v1119 = vmul.u32.u64.compose %v1115, %v1110
      %v1120 = vextract.low.u32 %v1119
      %v1121 = vextract.high.u32 %v1119
      %v1122 = vmul.u32 %v1115, %v1106
      %v1123 = vadd.s32 %v1118, %v1120
      %vm1124 = vc.u32 %v1118, %v1120
      %v1125 = vadd.s32 %v1121, 1
      %v1126 = vsel %vm1124, %v1125, %v1121
      %v1127 = vadd.s32 %v1122, %v1126
      %v1128 = vadd.s32 %v1127, 536870912
      %v1129 = vshrl.u32 %v1128, 30
      %v1130 = vshll.u32 %v1129, 30
      %v1131 = vsub.s32 %v1127, %v1130
      %vm1132 = vcmp.lt.s32.totalorder %v1131, 0
      %v1133 = vsub.s32 0, %v1131
      %v1134 = vsel %vm1132, %v1133, %v1131
      %v1135 = vclz %v1134
      %v1136 = vsub.s32 %v1135, 2
      %vm1137 = vcmp.gt.s32.totalorder 0, %v1136
      %v1138 = vsel %vm1137, 0, %v1136
      %v1139 = vsub.s32 32, %v1138
      %v1140 = vshll.u32 %v1131, %v1138
      %v1141 = vshrl.u32 %v1123, %v1139
      %v1142 = vor.u32 %v1140, %v1141
      %v1143 = vsub.s32 4294967266, %v1138
      %v1144 = vadd.s32 %v1143, 127
      %v1145 = vshll.u32 %v1144, 23
      %v1146 = vor.u32 4788187, %v1145
      %v1147 = vand.u32 2147483647, %v1146
      %v1149 = vcvt.s32.f32 %v1142
      %v1150 = vmul.f32 %v1149, %v1147
      %v1151 = vxor.u32 %v1150, 2147483648
      %v1152 = vsel %vm1069, %v1151, %v1150
      %v1153 = vsub.s32 4, %v1129
      %v1154 = vsel %vm1069, %v1153, %v1129
      %v1155 = vsel %vm1068, %v752, %v1152
      %v1156 = vsel %vm1068, 0, %v1154
      %v1157 = vcosq.f32.pop %v1155
      %v1158 = vsinq.f32.pop %v1155
      %vm1159 = vweird.f32 %v752
      %v1160 = vadd.s32 %v1156, 3
      %v1161 = vand.u32 %v1160, 3
      %vm1162 = vcmp.lt.s32.totalorder %v1161, 2
      %vm1163 = vcmp.eq.s32.totalorder %v1161, 0
      %v1164 = vxor.u32 %v1158, 2147483648
      %v1165 = vsel %vm1163, %v1157, %v1164
      %vm1166 = vcmp.eq.s32.totalorder %v1161, 2
      %v1167 = vxor.u32 %v1157, 2147483648
      %v1168 = vsel %vm1166, %v1167, %v1158
      %v1169 = vsel %vm1162, %v1165, %v1168
      %v1170 = vsel %vm1159, nan, %v1169
      %v1171 = vld [vmem:[%s1 + $0x40] sm:$0xff]
      %v1172 = vld [vmem:[%s1 + $0x48] sm:$0xff]
      %v1173 = vld [vmem:[%s1 + $0x50] sm:$0xff]
      %v1174 = vld [vmem:[%s1 + $0x58] sm:$0xff]
      %1176 = vset.pattern.permute.xlu0 32
      %1177 = vperm.xlu0 %1176, %v1171
      %v1178 = vpop.permute.xlu0 %1177
      %1181 = vset.pattern.permute.xlu0 32
      %1182 = vperm.xlu0 %1181, %v1172
      %v1183 = vpop.permute.xlu0 %1182
      %1186 = vset.pattern.permute.xlu0 32
      %1187 = vperm.xlu0 %1186, %v1173
      %v1188 = vpop.permute.xlu0 %1187
      %1191 = vset.pattern.permute.xlu0 32
      %1192 = vperm.xlu0 %1191, %v1174
      %v1193 = vpop.permute.xlu0 %1192
      %v1195 = vsel %vm661, %v1171, 0
      %v1197 = vsel %vm661, %v1172, 0
      %v1199 = vsel %vm661, %v1173, 0
      %v1201 = vsel %vm661, %v1174, 0
      %1203 = vmatprep.subr.mxu0 0.0
      %1204 = vmatpush1.msra.mxu0 %v858
      %1205 = vmatprep.subr.mxu0 0.0
      %1206 = vmatpush1.msra.mxu0 %v962
      %1207 = vmatprep.subr.mxu0 0.0
      %1208 = vmatpush1.msra.mxu0 %v1066
      %1209 = vmatprep.subr.mxu0 0.0
      %1210 = vmatpush1.msra.mxu0 %v1170
      %1211 = vmatprep.subr.mxu0 0.0
      %1212 = vmatpush1.msra.mxu0 0.0
      %1213 = vmatprep.subr.mxu0 0.0
      %1214 = vmatpush1.msra.mxu0 0.0
      %1215 = vmatprep.subr.mxu0 0.0
      %1216 = vmatpush1.msra.mxu0 0.0
      %1217 = vmatprep.subr.mxu0 0.0
      %1218 = vmatpush1.msra.mxu0 0.0
      %1219 = vmatprep.subr.mxu0 0.0
      %1220 = vmatpush1.msra.mxu0 0.0
      %1221 = vmatprep.subr.mxu0 0.0
      %1222 = vmatpush1.msra.mxu0 0.0
      %1223 = vmatprep.subr.mxu0 0.0
      %1224 = vmatpush1.msra.mxu0 0.0
      %1225 = vmatprep.subr.mxu0 0.0
      %1226 = vmatpush1.msra.mxu0 0.0
      %1227 = vmatprep.subr.mxu0 0.0
      %1228 = vmatpush1.msra.mxu0 0.0
      %1229 = vmatprep.subr.mxu0 0.0
      %1230 = vmatpush1.msra.mxu0 0.0
      %1231 = vmatprep.subr.mxu0 0.0
      %1232 = vmatpush1.msra.mxu0 0.0
      %1233 = vmatprep.subr.mxu0 0.0
      %1234 = vmatpush1.msra.mxu0 0.0
      %1235 = vmatprep.subr.mxu0 0.0
      %1236 = vmatpush1.msra.mxu0 0.0
      %1237 = vmatprep.subr.mxu0 0.0
      %1238 = vmatpush1.msra.mxu0 0.0
      %1239 = vmatprep.subr.mxu0 0.0
      %1240 = vmatpush1.msra.mxu0 0.0
      %1241 = vmatprep.subr.mxu0 0.0
      %1242 = vmatpush1.msra.mxu0 0.0
      %1243 = vmatprep.subr.mxu0 0.0
      %1244 = vmatpush1.msra.mxu0 0.0
      %1245 = vmatprep.subr.mxu0 0.0
      %1246 = vmatpush1.msra.mxu0 0.0
      %1247 = vmatprep.subr.mxu0 0.0
      %1248 = vmatpush1.msra.mxu0 0.0
      %1249 = vmatprep.subr.mxu0 0.0
      %1250 = vmatpush1.msra.mxu0 0.0
      %1251 = vmatprep.subr.mxu0 0.0
      %1252 = vmatpush1.msra.mxu0 0.0
      %1253 = vmatprep.subr.mxu0 0.0
      %1254 = vmatpush1.msra.mxu0 0.0
      %1255 = vmatprep.subr.mxu0 0.0
      %1256 = vmatpush1.msra.mxu0 0.0
      %1257 = vmatprep.subr.mxu0 0.0
      %1258 = vmatpush1.msra.mxu0 0.0
      %1259 = vmatprep.subr.mxu0 0.0
      %1260 = vmatpush1.msra.mxu0 0.0
      %1261 = vmatprep.subr.mxu0 0.0
      %1262 = vmatpush1.msra.mxu0 0.0
      %1263 = vmatprep.subr.mxu0 0.0
      %1264 = vmatpush1.msra.mxu0 0.0
      %1265 = vmatprep.subr.mxu0 0.0
      %1266 = vmatpush1.msra.mxu0 0.0
      %1267 = vmatprep.mubr.f32.mxu0 0.0
      %1268 = vmatmul.mubr.f32.gmra.mrb[0].mxu0 %v1195
      %v1269 = vpop.f32.mrb[0].mxu0
      %v1270 = vadd.f32 %v1178, %v1269
      %v1271 = vpop.f32.mrb[0].mxu0
      %1272 = vmatprep.mubr.f32.mxu0 0.0
      %1273 = vmatmul.mubr.f32.gmra.mrb[0].mxu0 %v1197
      %v1274 = vpop.f32.mrb[0].mxu0
      %v1275 = vadd.f32 %v1183, %v1274
      %v1276 = vpop.f32.mrb[0].mxu0
      %1277 = vmatprep.mubr.f32.mxu0 0.0
      %1278 = vmatmul.mubr.f32.gmra.mrb[0].mxu0 %v1199
      %v1279 = vpop.f32.mrb[0].mxu0
      %v1280 = vadd.f32 %v1188, %v1279
      %v1281 = vpop.f32.mrb[0].mxu0
      %1282 = vmatprep.mubr.f32.mxu0 0.0
      %1283 = vmatmul.mubr.f32.gmra.mrb[0].mxu0 %v1201
      %v1284 = vpop.f32.mrb[0].mxu0
      %v1285 = vadd.f32 %v1193, %v1284
      %v1286 = vpop.f32.mrb[0].mxu0
      %1287 = vdwg.mxu0
      %v1288 = vand.u32 2147483647, %v1270
      %vm1289 = vcmp.le.f32.partialorder %v1288, 0.7853982
      %vm1290 = vcmp.lt.s32.totalorder %v1270, 0
      %v1291 = vand.u32 %v1270, 2139095040
      %v1292 = vshrl.u32 %v1291, 23
      %v1293 = vsub.s32 %v1292, 127
      %v1294 = vand.u32 2147483647, %v1270
      %v1295 = vand.u32 %v1294, 8388607
      %v1296 = vor.u32 %v1295, 8388608
      %v1297 = vsub.s32 0, %v1296
      %v1298 = vadd.s32 %v1293, 1
      %vm1299 = vcmp.gt.s32.totalorder %v1298, 0
      %v1300 = vsel %vm1299, %v1298, 0
      %v1301 = vshrl.u32 %v1300, 5
      %v1302 = vand.u32 %v1300, 31
      %v1303 = vsub.s32 32, %v1302
      %v1304 = vshrl.u32 683565275, %v1303
      %v1305 = vshll.u32 683565275, %v1302
      %v1306 = vshrl.u32 2475754826, %v1303
      %v1307 = vor.u32 %v1305, %v1306
      %v1308 = vshll.u32 2475754826, %v1302
      %v1309 = vshrl.u32 2131351028, %v1303
      %v1310 = vor.u32 %v1308, %v1309
      %v1311 = vshll.u32 2131351028, %v1302
      %v1312 = vshrl.u32 2102212464, %v1303
      %v1313 = vor.u32 %v1311, %v1312
      %v1314 = vshll.u32 2102212464, %v1302
      %v1315 = vshrl.u32 920167782, %v1303
      %v1316 = vor.u32 %v1314, %v1315
      %v1317 = vshll.u32 920167782, %v1302
      %v1318 = vshrl.u32 1326507024, %v1303
      %v1319 = vor.u32 %v1317, %v1318
      %vm1320 = vcmp.lt.s32.totalorder %v1301, 1
      %vm1321 = vcmp.lt.s32.totalorder %v1301, 2
      %vm1322 = vcmp.lt.s32.totalorder %v1301, 3
      %vm1323 = vcmp.lt.s32.totalorder %v1301, 4
      %v1324 = vsel %vm1320, %v1304, %v1307
      %v1325 = vsel %vm1323, %v1313, 2102212464
      %v1326 = vsel %vm1322, %v1310, %v1325
      %v1327 = vsel %vm1321, %v1324, %v1326
      %v1328 = vsel %vm1320, %v1307, %v1310
      %v1329 = vsel %vm1323, %v1316, 920167782
      %v1330 = vsel %vm1322, %v1313, %v1329
      %v1331 = vsel %vm1321, %v1328, %v1330
      %v1332 = vsel %vm1320, %v1310, %v1313
      %v1333 = vsel %vm1323, %v1319, 1326507024
      %v1334 = vsel %vm1322, %v1316, %v1333
      %v1335 = vsel %vm1321, %v1332, %v1334
      %v1336 = vshll.u32 %v1296, 8
      %v1337 = vmul.u32.u64.compose %v1336, %v1335
      %v1338 = vextract.low.u32 %v1337
      %v1339 = vextract.high.u32 %v1337
      %v1340 = vmul.u32.u64.compose %v1336, %v1331
      %v1341 = vextract.low.u32 %v1340
      %v1342 = vextract.high.u32 %v1340
      %v1343 = vmul.u32 %v1336, %v1327
      %v1344 = vadd.s32 %v1339, %v1341
      %vm1345 = vc.u32 %v1339, %v1341
      %v1346 = vadd.s32 %v1342, 1
      %v1347 = vsel %vm1345, %v1346, %v1342
      %v1348 = vadd.s32 %v1343, %v1347
      %v1349 = vadd.s32 %v1348, 536870912
      %v1350 = vshrl.u32 %v1349, 30
      %v1351 = vshll.u32 %v1350, 30
      %v1352 = vsub.s32 %v1348, %v1351
      %vm1353 = vcmp.lt.s32.totalorder %v1352, 0
      %v1354 = vsub.s32 0, %v1352
      %v1355 = vsel %vm1353, %v1354, %v1352
      %v1356 = vclz %v1355
      %v1357 = vsub.s32 %v1356, 2
      %vm1358 = vcmp.gt.s32.totalorder 0, %v1357
      %v1359 = vsel %vm1358, 0, %v1357
      %v1360 = vsub.s32 32, %v1359
      %v1361 = vshll.u32 %v1352, %v1359
      %v1362 = vshrl.u32 %v1344, %v1360
      %v1363 = vor.u32 %v1361, %v1362
      %v1364 = vsub.s32 4294967266, %v1359
      %v1365 = vadd.s32 %v1364, 127
      %v1366 = vshll.u32 %v1365, 23
      %v1367 = vor.u32 4788187, %v1366
      %v1368 = vand.u32 2147483647, %v1367
      %v1370 = vcvt.s32.f32 %v1363
      %v1371 = vmul.f32 %v1370, %v1368
      %v1372 = vxor.u32 %v1371, 2147483648
      %v1373 = vsel %vm1290, %v1372, %v1371
      %v1374 = vsub.s32 4, %v1350
      %v1375 = vsel %vm1290, %v1374, %v1350
      %v1376 = vsel %vm1289, %v1270, %v1373
      %v1377 = vsel %vm1289, 0, %v1375
      %v1378 = vcosq.f32.pop %v1376
      %v1379 = vsinq.f32.pop %v1376
      %vm1380 = vweird.f32 %v1270
      %v1381 = vadd.s32 %v1377, 3
      %v1382 = vand.u32 %v1381, 3
      %vm1383 = vcmp.lt.s32.totalorder %v1382, 2
      %vm1384 = vcmp.eq.s32.totalorder %v1382, 0
      %v1385 = vxor.u32 %v1379, 2147483648
      %v1386 = vsel %vm1384, %v1378, %v1385
      %vm1387 = vcmp.eq.s32.totalorder %v1382, 2
      %v1388 = vxor.u32 %v1378, 2147483648
      %v1389 = vsel %vm1387, %v1388, %v1379
      %v1390 = vsel %vm1383, %v1386, %v1389
      %v1391 = vsel %vm1380, nan, %v1390
      %v1392 = vand.u32 2147483647, %v1275
      %vm1393 = vcmp.le.f32.partialorder %v1392, 0.7853982
      %vm1394 = vcmp.lt.s32.totalorder %v1275, 0
      %v1395 = vand.u32 %v1275, 2139095040
      %v1396 = vshrl.u32 %v1395, 23
      %v1397 = vsub.s32 %v1396, 127
      %v1398 = vand.u32 2147483647, %v1275
      %v1399 = vand.u32 %v1398, 8388607
      %v1400 = vor.u32 %v1399, 8388608
      %v1401 = vsub.s32 0, %v1400
      %v1402 = vadd.s32 %v1397, 1
      %vm1403 = vcmp.gt.s32.totalorder %v1402, 0
      %v1404 = vsel %vm1403, %v1402, 0
      %v1405 = vshrl.u32 %v1404, 5
      %v1406 = vand.u32 %v1404, 31
      %v1407 = vsub.s32 32, %v1406
      %v1408 = vshrl.u32 683565275, %v1407
      %v1409 = vshll.u32 683565275, %v1406
      %v1410 = vshrl.u32 2475754826, %v1407
      %v1411 = vor.u32 %v1409, %v1410
      %v1412 = vshll.u32 2475754826, %v1406
      %v1413 = vshrl.u32 2131351028, %v1407
      %v1414 = vor.u32 %v1412, %v1413
      %v1415 = vshll.u32 2131351028, %v1406
      %v1416 = vshrl.u32 2102212464, %v1407
      %v1417 = vor.u32 %v1415, %v1416
      %v1418 = vshll.u32 2102212464, %v1406
      %v1419 = vshrl.u32 920167782, %v1407
      %v1420 = vor.u32 %v1418, %v1419
      %v1421 = vshll.u32 920167782, %v1406
      %v1422 = vshrl.u32 1326507024, %v1407
      %v1423 = vor.u32 %v1421, %v1422
      %vm1424 = vcmp.lt.s32.totalorder %v1405, 1
      %vm1425 = vcmp.lt.s32.totalorder %v1405, 2
      %vm1426 = vcmp.lt.s32.totalorder %v1405, 3
      %vm1427 = vcmp.lt.s32.totalorder %v1405, 4
      %v1428 = vsel %vm1424, %v1408, %v1411
      %v1429 = vsel %vm1427, %v1417, 2102212464
      %v1430 = vsel %vm1426, %v1414, %v1429
      %v1431 = vsel %vm1425, %v1428, %v1430
      %v1432 = vsel %vm1424, %v1411, %v1414
      %v1433 = vsel %vm1427, %v1420, 920167782
      %v1434 = vsel %vm1426, %v1417, %v1433
      %v1435 = vsel %vm1425, %v1432, %v1434
      %v1436 = vsel %vm1424, %v1414, %v1417
      %v1437 = vsel %vm1427, %v1423, 1326507024
      %v1438 = vsel %vm1426, %v1420, %v1437
      %v1439 = vsel %vm1425, %v1436, %v1438
      %v1440 = vshll.u32 %v1400, 8
      %v1441 = vmul.u32.u64.compose %v1440, %v1439
      %v1442 = vextract.low.u32 %v1441
      %v1443 = vextract.high.u32 %v1441
      %v1444 = vmul.u32.u64.compose %v1440, %v1435
      %v1445 = vextract.low.u32 %v1444
      %v1446 = vextract.high.u32 %v1444
      %v1447 = vmul.u32 %v1440, %v1431
      %v1448 = vadd.s32 %v1443, %v1445
      %vm1449 = vc.u32 %v1443, %v1445
      %v1450 = vadd.s32 %v1446, 1
      %v1451 = vsel %vm1449, %v1450, %v1446
      %v1452 = vadd.s32 %v1447, %v1451
      %v1453 = vadd.s32 %v1452, 536870912
      %v1454 = vshrl.u32 %v1453, 30
      %v1455 = vshll.u32 %v1454, 30
      %v1456 = vsub.s32 %v1452, %v1455
      %vm1457 = vcmp.lt.s32.totalorder %v1456, 0
      %v1458 = vsub.s32 0, %v1456
      %v1459 = vsel %vm1457, %v1458, %v1456
      %v1460 = vclz %v1459
      %v1461 = vsub.s32 %v1460, 2
      %vm1462 = vcmp.gt.s32.totalorder 0, %v1461
      %v1463 = vsel %vm1462, 0, %v1461
      %v1464 = vsub.s32 32, %v1463
      %v1465 = vshll.u32 %v1456, %v1463
      %v1466 = vshrl.u32 %v1448, %v1464
      %v1467 = vor.u32 %v1465, %v1466
      %v1468 = vsub.s32 4294967266, %v1463
      %v1469 = vadd.s32 %v1468, 127
      %v1470 = vshll.u32 %v1469, 23
      %v1471 = vor.u32 4788187, %v1470
      %v1472 = vand.u32 2147483647, %v1471
      %v1474 = vcvt.s32.f32 %v1467
      %v1475 = vmul.f32 %v1474, %v1472
      %v1476 = vxor.u32 %v1475, 2147483648
      %v1477 = vsel %vm1394, %v1476, %v1475
      %v1478 = vsub.s32 4, %v1454
      %v1479 = vsel %vm1394, %v1478, %v1454
      %v1480 = vsel %vm1393, %v1275, %v1477
      %v1481 = vsel %vm1393, 0, %v1479
      %v1482 = vcosq.f32.pop %v1480
      %v1483 = vsinq.f32.pop %v1480
      %vm1484 = vweird.f32 %v1275
      %v1485 = vadd.s32 %v1481, 3
      %v1486 = vand.u32 %v1485, 3
      %vm1487 = vcmp.lt.s32.totalorder %v1486, 2
      %vm1488 = vcmp.eq.s32.totalorder %v1486, 0
      %v1489 = vxor.u32 %v1483, 2147483648
      %v1490 = vsel %vm1488, %v1482, %v1489
      %vm1491 = vcmp.eq.s32.totalorder %v1486, 2
      %v1492 = vxor.u32 %v1482, 2147483648
      %v1493 = vsel %vm1491, %v1492, %v1483
      %v1494 = vsel %vm1487, %v1490, %v1493
      %v1495 = vsel %vm1484, nan, %v1494
      %v1496 = vand.u32 2147483647, %v1280
      %vm1497 = vcmp.le.f32.partialorder %v1496, 0.7853982
      %vm1498 = vcmp.lt.s32.totalorder %v1280, 0
      %v1499 = vand.u32 %v1280, 2139095040
      %v1500 = vshrl.u32 %v1499, 23
      %v1501 = vsub.s32 %v1500, 127
      %v1502 = vand.u32 2147483647, %v1280
      %v1503 = vand.u32 %v1502, 8388607
      %v1504 = vor.u32 %v1503, 8388608
      %v1505 = vsub.s32 0, %v1504
      %v1506 = vadd.s32 %v1501, 1
      %vm1507 = vcmp.gt.s32.totalorder %v1506, 0
      %v1508 = vsel %vm1507, %v1506, 0
      %v1509 = vshrl.u32 %v1508, 5
      %v1510 = vand.u32 %v1508, 31
      %v1511 = vsub.s32 32, %v1510
      %v1512 = vshrl.u32 683565275, %v1511
      %v1513 = vshll.u32 683565275, %v1510
      %v1514 = vshrl.u32 2475754826, %v1511
      %v1515 = vor.u32 %v1513, %v1514
      %v1516 = vshll.u32 2475754826, %v1510
      %v1517 = vshrl.u32 2131351028, %v1511
      %v1518 = vor.u32 %v1516, %v1517
      %v1519 = vshll.u32 2131351028, %v1510
      %v1520 = vshrl.u32 2102212464, %v1511
      %v1521 = vor.u32 %v1519, %v1520
      %v1522 = vshll.u32 2102212464, %v1510
      %v1523 = vshrl.u32 920167782, %v1511
      %v1524 = vor.u32 %v1522, %v1523
      %v1525 = vshll.u32 920167782, %v1510
      %v1526 = vshrl.u32 1326507024, %v1511
      %v1527 = vor.u32 %v1525, %v1526
      %vm1528 = vcmp.lt.s32.totalorder %v1509, 1
      %vm1529 = vcmp.lt.s32.totalorder %v1509, 2
      %vm1530 = vcmp.lt.s32.totalorder %v1509, 3
      %vm1531 = vcmp.lt.s32.totalorder %v1509, 4
      %v1532 = vsel %vm1528, %v1512, %v1515
      %v1533 = vsel %vm1531, %v1521, 2102212464
      %v1534 = vsel %vm1530, %v1518, %v1533
      %v1535 = vsel %vm1529, %v1532, %v1534
      %v1536 = vsel %vm1528, %v1515, %v1518
      %v1537 = vsel %vm1531, %v1524, 920167782
      %v1538 = vsel %vm1530, %v1521, %v1537
      %v1539 = vsel %vm1529, %v1536, %v1538
      %v1540 = vsel %vm1528, %v1518, %v1521
      %v1541 = vsel %vm1531, %v1527, 1326507024
      %v1542 = vsel %vm1530, %v1524, %v1541
      %v1543 = vsel %vm1529, %v1540, %v1542
      %v1544 = vshll.u32 %v1504, 8
      %v1545 = vmul.u32.u64.compose %v1544, %v1543
      %v1546 = vextract.low.u32 %v1545
      %v1547 = vextract.high.u32 %v1545
      %v1548 = vmul.u32.u64.compose %v1544, %v1539
      %v1549 = vextract.low.u32 %v1548
      %v1550 = vextract.high.u32 %v1548
      %v1551 = vmul.u32 %v1544, %v1535
      %v1552 = vadd.s32 %v1547, %v1549
      %vm1553 = vc.u32 %v1547, %v1549
      %v1554 = vadd.s32 %v1550, 1
      %v1555 = vsel %vm1553, %v1554, %v1550
      %v1556 = vadd.s32 %v1551, %v1555
      %v1557 = vadd.s32 %v1556, 536870912
      %v1558 = vshrl.u32 %v1557, 30
      %v1559 = vshll.u32 %v1558, 30
      %v1560 = vsub.s32 %v1556, %v1559
      %vm1561 = vcmp.lt.s32.totalorder %v1560, 0
      %v1562 = vsub.s32 0, %v1560
      %v1563 = vsel %vm1561, %v1562, %v1560
      %v1564 = vclz %v1563
      %v1565 = vsub.s32 %v1564, 2
      %vm1566 = vcmp.gt.s32.totalorder 0, %v1565
      %v1567 = vsel %vm1566, 0, %v1565
      %v1568 = vsub.s32 32, %v1567
      %v1569 = vshll.u32 %v1560, %v1567
      %v1570 = vshrl.u32 %v1552, %v1568
      %v1571 = vor.u32 %v1569, %v1570
      %v1572 = vsub.s32 4294967266, %v1567
      %v1573 = vadd.s32 %v1572, 127
      %v1574 = vshll.u32 %v1573, 23
      %v1575 = vor.u32 4788187, %v1574
      %v1576 = vand.u32 2147483647, %v1575
      %v1578 = vcvt.s32.f32 %v1571
      %v1579 = vmul.f32 %v1578, %v1576
      %v1580 = vxor.u32 %v1579, 2147483648
      %v1581 = vsel %vm1498, %v1580, %v1579
      %v1582 = vsub.s32 4, %v1558
      %v1583 = vsel %vm1498, %v1582, %v1558
      %v1584 = vsel %vm1497, %v1280, %v1581
      %v1585 = vsel %vm1497, 0, %v1583
      %v1586 = vcosq.f32.pop %v1584
      %v1587 = vsinq.f32.pop %v1584
      %vm1588 = vweird.f32 %v1280
      %v1589 = vadd.s32 %v1585, 3
      %v1590 = vand.u32 %v1589, 3
      %vm1591 = vcmp.lt.s32.totalorder %v1590, 2
      %vm1592 = vcmp.eq.s32.totalorder %v1590, 0
      %v1593 = vxor.u32 %v1587, 2147483648
      %v1594 = vsel %vm1592, %v1586, %v1593
      %vm1595 = vcmp.eq.s32.totalorder %v1590, 2
      %v1596 = vxor.u32 %v1586, 2147483648
      %v1597 = vsel %vm1595, %v1596, %v1587
      %v1598 = vsel %vm1591, %v1594, %v1597
      %v1599 = vsel %vm1588, nan, %v1598
      %v1600 = vand.u32 2147483647, %v1285
      %vm1601 = vcmp.le.f32.partialorder %v1600, 0.7853982
      %vm1602 = vcmp.lt.s32.totalorder %v1285, 0
      %v1603 = vand.u32 %v1285, 2139095040
      %v1604 = vshrl.u32 %v1603, 23
      %v1605 = vsub.s32 %v1604, 127
      %v1606 = vand.u32 2147483647, %v1285
      %v1607 = vand.u32 %v1606, 8388607
      %v1608 = vor.u32 %v1607, 8388608
      %v1609 = vsub.s32 0, %v1608
      %v1610 = vadd.s32 %v1605, 1
      %vm1611 = vcmp.gt.s32.totalorder %v1610, 0
      %v1612 = vsel %vm1611, %v1610, 0
      %v1613 = vshrl.u32 %v1612, 5
      %v1614 = vand.u32 %v1612, 31
      %v1615 = vsub.s32 32, %v1614
      %v1616 = vshrl.u32 683565275, %v1615
      %v1617 = vshll.u32 683565275, %v1614
      %v1618 = vshrl.u32 2475754826, %v1615
      %v1619 = vor.u32 %v1617, %v1618
      %v1620 = vshll.u32 2475754826, %v1614
      %v1621 = vshrl.u32 2131351028, %v1615
      %v1622 = vor.u32 %v1620, %v1621
      %v1623 = vshll.u32 2131351028, %v1614
      %v1624 = vshrl.u32 2102212464, %v1615
      %v1625 = vor.u32 %v1623, %v1624
      %v1626 = vshll.u32 2102212464, %v1614
      %v1627 = vshrl.u32 920167782, %v1615
      %v1628 = vor.u32 %v1626, %v1627
      %v1629 = vshll.u32 920167782, %v1614
      %v1630 = vshrl.u32 1326507024, %v1615
      %v1631 = vor.u32 %v1629, %v1630
      %vm1632 = vcmp.lt.s32.totalorder %v1613, 1
      %vm1633 = vcmp.lt.s32.totalorder %v1613, 2
      %vm1634 = vcmp.lt.s32.totalorder %v1613, 3
      %vm1635 = vcmp.lt.s32.totalorder %v1613, 4
      %v1636 = vsel %vm1632, %v1616, %v1619
      %v1637 = vsel %vm1635, %v1625, 2102212464
      %v1638 = vsel %vm1634, %v1622, %v1637
      %v1639 = vsel %vm1633, %v1636, %v1638
      %v1640 = vsel %vm1632, %v1619, %v1622
      %v1641 = vsel %vm1635, %v1628, 920167782
      %v1642 = vsel %vm1634, %v1625, %v1641
      %v1643 = vsel %vm1633, %v1640, %v1642
      %v1644 = vsel %vm1632, %v1622, %v1625
      %v1645 = vsel %vm1635, %v1631, 1326507024
      %v1646 = vsel %vm1634, %v1628, %v1645
      %v1647 = vsel %vm1633, %v1644, %v1646
      %v1648 = vshll.u32 %v1608, 8
      %v1649 = vmul.u32.u64.compose %v1648, %v1647
      %v1650 = vextract.low.u32 %v1649
      %v1651 = vextract.high.u32 %v1649
      %v1652 = vmul.u32.u64.compose %v1648, %v1643
      %v1653 = vextract.low.u32 %v1652
      %v1654 = vextract.high.u32 %v1652
      %v1655 = vmul.u32 %v1648, %v1639
      %v1656 = vadd.s32 %v1651, %v1653
      %vm1657 = vc.u32 %v1651, %v1653
      %v1658 = vadd.s32 %v1654, 1
      %v1659 = vsel %vm1657, %v1658, %v1654
      %v1660 = vadd.s32 %v1655, %v1659
      %v1661 = vadd.s32 %v1660, 536870912
      %v1662 = vshrl.u32 %v1661, 30
      %v1663 = vshll.u32 %v1662, 30
      %v1664 = vsub.s32 %v1660, %v1663
      %vm1665 = vcmp.lt.s32.totalorder %v1664, 0
      %v1666 = vsub.s32 0, %v1664
      %v1667 = vsel %vm1665, %v1666, %v1664
      %v1668 = vclz %v1667
      %v1669 = vsub.s32 %v1668, 2
      %vm1670 = vcmp.gt.s32.totalorder 0, %v1669
      %v1671 = vsel %vm1670, 0, %v1669
      %v1672 = vsub.s32 32, %v1671
      %v1673 = vshll.u32 %v1664, %v1671
      %v1674 = vshrl.u32 %v1656, %v1672
      %v1675 = vor.u32 %v1673, %v1674
      %v1676 = vsub.s32 4294967266, %v1671
      %v1677 = vadd.s32 %v1676, 127
      %v1678 = vshll.u32 %v1677, 23
      %v1679 = vor.u32 4788187, %v1678
      %v1680 = vand.u32 2147483647, %v1679
      %v1682 = vcvt.s32.f32 %v1675
      %v1683 = vmul.f32 %v1682, %v1680
      %v1684 = vxor.u32 %v1683, 2147483648
      %v1685 = vsel %vm1602, %v1684, %v1683
      %v1686 = vsub.s32 4, %v1662
      %v1687 = vsel %vm1602, %v1686, %v1662
      %v1688 = vsel %vm1601, %v1285, %v1685
      %v1689 = vsel %vm1601, 0, %v1687
      %v1690 = vcosq.f32.pop %v1688
      %v1691 = vsinq.f32.pop %v1688
      %vm1692 = vweird.f32 %v1285
      %v1693 = vadd.s32 %v1689, 3
      %v1694 = vand.u32 %v1693, 3
      %vm1695 = vcmp.lt.s32.totalorder %v1694, 2
      %vm1696 = vcmp.eq.s32.totalorder %v1694, 0
      %v1697 = vxor.u32 %v1691, 2147483648
      %v1698 = vsel %vm1696, %v1690, %v1697
      %vm1699 = vcmp.eq.s32.totalorder %v1694, 2
      %v1700 = vxor.u32 %v1690, 2147483648
      %v1701 = vsel %vm1699, %v1700, %v1691
      %v1702 = vsel %vm1695, %v1698, %v1701
      %v1703 = vsel %vm1692, nan, %v1702
      %v1704 = vld [vmem:[%s1 + $0x60] sm:$0xff]
      %v1705 = vld [vmem:[%s1 + $0x68] sm:$0xff]
      %v1706 = vld [vmem:[%s1 + $0x70] sm:$0xff]
      %v1707 = vld [vmem:[%s1 + $0x78] sm:$0xff]
      %1709 = vset.pattern.permute.xlu0 32
      %1710 = vperm.xlu0 %1709, %v1704
      %v1711 = vpop.permute.xlu0 %1710
      %1714 = vset.pattern.permute.xlu0 32
      %1715 = vperm.xlu0 %1714, %v1705
      %v1716 = vpop.permute.xlu0 %1715
      %1719 = vset.pattern.permute.xlu0 32
      %1720 = vperm.xlu0 %1719, %v1706
      %v1721 = vpop.permute.xlu0 %1720
      %1724 = vset.pattern.permute.xlu0 32
      %1725 = vperm.xlu0 %1724, %v1707
      %v1726 = vpop.permute.xlu0 %1725
      %v1728 = vsel %vm661, %v1704, 0
      %v1730 = vsel %vm661, %v1705, 0
      %v1732 = vsel %vm661, %v1706, 0
      %v1734 = vsel %vm661, %v1707, 0
      %1736 = vmatprep.subr.mxu0 0.0
      %1737 = vmatpush1.msra.mxu0 %v1391
      %1738 = vmatprep.subr.mxu0 0.0
      %1739 = vmatpush1.msra.mxu0 %v1495
      %1740 = vmatprep.subr.mxu0 0.0
      %1741 = vmatpush1.msra.mxu0 %v1599
      %1742 = vmatprep.subr.mxu0 0.0
      %1743 = vmatpush1.msra.mxu0 %v1703
      %1744 = vmatprep.subr.mxu0 0.0
      %1745 = vmatpush1.msra.mxu0 0.0
      %1746 = vmatprep.subr.mxu0 0.0
      %1747 = vmatpush1.msra.mxu0 0.0
      %1748 = vmatprep.subr.mxu0 0.0
      %1749 = vmatpush1.msra.mxu0 0.0
      %1750 = vmatprep.subr.mxu0 0.0
      %1751 = vmatpush1.msra.mxu0 0.0
      %1752 = vmatprep.subr.mxu0 0.0
      %1753 = vmatpush1.msra.mxu0 0.0
      %1754 = vmatprep.subr.mxu0 0.0
      %1755 = vmatpush1.msra.mxu0 0.0
      %1756 = vmatprep.subr.mxu0 0.0
      %1757 = vmatpush1.msra.mxu0 0.0
      %1758 = vmatprep.subr.mxu0 0.0
      %1759 = vmatpush1.msra.mxu0 0.0
      %1760 = vmatprep.subr.mxu0 0.0
      %1761 = vmatpush1.msra.mxu0 0.0
      %1762 = vmatprep.subr.mxu0 0.0
      %1763 = vmatpush1.msra.mxu0 0.0
      %1764 = vmatprep.subr.mxu0 0.0
      %1765 = vmatpush1.msra.mxu0 0.0
      %1766 = vmatprep.subr.mxu0 0.0
      %1767 = vmatpush1.msra.mxu0 0.0
      %1768 = vmatprep.subr.mxu0 0.0
      %1769 = vmatpush1.msra.mxu0 0.0
      %1770 = vmatprep.subr.mxu0 0.0
      %1771 = vmatpush1.msra.mxu0 0.0
      %1772 = vmatprep.subr.mxu0 0.0
      %1773 = vmatpush1.msra.mxu0 0.0
      %1774 = vmatprep.subr.mxu0 0.0
      %1775 = vmatpush1.msra.mxu0 0.0
      %1776 = vmatprep.subr.mxu0 0.0
      %1777 = vmatpush1.msra.mxu0 0.0
      %1778 = vmatprep.subr.mxu0 0.0
      %1779 = vmatpush1.msra.mxu0 0.0
      %1780 = vmatprep.subr.mxu0 0.0
      %1781 = vmatpush1.msra.mxu0 0.0
      %1782 = vmatprep.subr.mxu0 0.0
      %1783 = vmatpush1.msra.mxu0 0.0
      %1784 = vmatprep.subr.mxu0 0.0
      %1785 = vmatpush1.msra.mxu0 0.0
      %1786 = vmatprep.subr.mxu0 0.0
      %1787 = vmatpush1.msra.mxu0 0.0
      %1788 = vmatprep.subr.mxu0 0.0
      %1789 = vmatpush1.msra.mxu0 0.0
      %1790 = vmatprep.subr.mxu0 0.0
      %1791 = vmatpush1.msra.mxu0 0.0
      %1792 = vmatprep.subr.mxu0 0.0
      %1793 = vmatpush1.msra.mxu0 0.0
      %1794 = vmatprep.subr.mxu0 0.0
      %1795 = vmatpush1.msra.mxu0 0.0
      %1796 = vmatprep.subr.mxu0 0.0
      %1797 = vmatpush1.msra.mxu0 0.0
      %1798 = vmatprep.subr.mxu0 0.0
      %1799 = vmatpush1.msra.mxu0 0.0
      %1800 = vmatprep.mubr.f32.mxu0 0.0
      %1801 = vmatmul.mubr.f32.gmra.mrb[0].mxu0 %v1728
      %v1802 = vpop.f32.mrb[0].mxu0
      %v1803 = vadd.f32 %v1711, %v1802
      %v1804 = vpop.f32.mrb[0].mxu0
      %1805 = vmatprep.mubr.f32.mxu0 0.0
      %1806 = vmatmul.mubr.f32.gmra.mrb[0].mxu0 %v1730
      %v1807 = vpop.f32.mrb[0].mxu0
      %v1808 = vadd.f32 %v1716, %v1807
      %v1809 = vpop.f32.mrb[0].mxu0
      %1810 = vmatprep.mubr.f32.mxu0 0.0
      %1811 = vmatmul.mubr.f32.gmra.mrb[0].mxu0 %v1732
      %v1812 = vpop.f32.mrb[0].mxu0
      %v1813 = vadd.f32 %v1721, %v1812
      %v1814 = vpop.f32.mrb[0].mxu0
      %1815 = vmatprep.mubr.f32.mxu0 0.0
      %1816 = vmatmul.mubr.f32.gmra.mrb[0].mxu0 %v1734
      %v1817 = vpop.f32.mrb[0].mxu0
      %v1818 = vadd.f32 %v1726, %v1817
      %v1819 = vpop.f32.mrb[0].mxu0
      %1820 = vdwg.mxu0
      %v1821 = vand.u32 2147483647, %v1803
      %vm1822 = vcmp.le.f32.partialorder %v1821, 0.7853982
      %vm1823 = vcmp.lt.s32.totalorder %v1803, 0
      %v1824 = vand.u32 %v1803, 2139095040
      %v1825 = vshrl.u32 %v1824, 23
      %v1826 = vsub.s32 %v1825, 127
      %v1827 = vand.u32 2147483647, %v1803
      %v1828 = vand.u32 %v1827, 8388607
      %v1829 = vor.u32 %v1828, 8388608
      %v1830 = vsub.s32 0, %v1829
      %v1831 = vadd.s32 %v1826, 1
      %vm1832 = vcmp.gt.s32.totalorder %v1831, 0
      %v1833 = vsel %vm1832, %v1831, 0
      %v1834 = vshrl.u32 %v1833, 5
      %v1835 = vand.u32 %v1833, 31
      %v1836 = vsub.s32 32, %v1835
      %v1837 = vshrl.u32 683565275, %v1836
      %v1838 = vshll.u32 683565275, %v1835
      %v1839 = vshrl.u32 2475754826, %v1836
      %v1840 = vor.u32 %v1838, %v1839
      %v1841 = vshll.u32 2475754826, %v1835
      %v1842 = vshrl.u32 2131351028, %v1836
      %v1843 = vor.u32 %v1841, %v1842
      %v1844 = vshll.u32 2131351028, %v1835
      %v1845 = vshrl.u32 2102212464, %v1836
      %v1846 = vor.u32 %v1844, %v1845
      %v1847 = vshll.u32 2102212464, %v1835
      %v1848 = vshrl.u32 920167782, %v1836
      %v1849 = vor.u32 %v1847, %v1848
      %v1850 = vshll.u32 920167782, %v1835
      %v1851 = vshrl.u32 1326507024, %v1836
      %v1852 = vor.u32 %v1850, %v1851
      %vm1853 = vcmp.lt.s32.totalorder %v1834, 1
      %vm1854 = vcmp.lt.s32.totalorder %v1834, 2
      %vm1855 = vcmp.lt.s32.totalorder %v1834, 3
      %vm1856 = vcmp.lt.s32.totalorder %v1834, 4
      %v1857 = vsel %vm1853, %v1837, %v1840
      %v1858 = vsel %vm1856, %v1846, 2102212464
      %v1859 = vsel %vm1855, %v1843, %v1858
      %v1860 = vsel %vm1854, %v1857, %v1859
      %v1861 = vsel %vm1853, %v1840, %v1843
      %v1862 = vsel %vm1856, %v1849, 920167782
      %v1863 = vsel %vm1855, %v1846, %v1862
      %v1864 = vsel %vm1854, %v1861, %v1863
      %v1865 = vsel %vm1853, %v1843, %v1846
      %v1866 = vsel %vm1856, %v1852, 1326507024
      %v1867 = vsel %vm1855, %v1849, %v1866
      %v1868 = vsel %vm1854, %v1865, %v1867
      %v1869 = vshll.u32 %v1829, 8
      %v1870 = vmul.u32.u64.compose %v1869, %v1868
      %v1871 = vextract.low.u32 %v1870
      %v1872 = vextract.high.u32 %v1870
      %v1873 = vmul.u32.u64.compose %v1869, %v1864
      %v1874 = vextract.low.u32 %v1873
      %v1875 = vextract.high.u32 %v1873
      %v1876 = vmul.u32 %v1869, %v1860
      %v1877 = vadd.s32 %v1872, %v1874
      %vm1878 = vc.u32 %v1872, %v1874
      %v1879 = vadd.s32 %v1875, 1
      %v1880 = vsel %vm1878, %v1879, %v1875
      %v1881 = vadd.s32 %v1876, %v1880
      %v1882 = vadd.s32 %v1881, 536870912
      %v1883 = vshrl.u32 %v1882, 30
      %v1884 = vshll.u32 %v1883, 30
      %v1885 = vsub.s32 %v1881, %v1884
      %vm1886 = vcmp.lt.s32.totalorder %v1885, 0
      %v1887 = vsub.s32 0, %v1885
      %v1888 = vsel %vm1886, %v1887, %v1885
      %v1889 = vclz %v1888
      %v1890 = vsub.s32 %v1889, 2
      %vm1891 = vcmp.gt.s32.totalorder 0, %v1890
      %v1892 = vsel %vm1891, 0, %v1890
      %v1893 = vsub.s32 32, %v1892
      %v1894 = vshll.u32 %v1885, %v1892
      %v1895 = vshrl.u32 %v1877, %v1893
      %v1896 = vor.u32 %v1894, %v1895
      %v1897 = vsub.s32 4294967266, %v1892
      %v1898 = vadd.s32 %v1897, 127
      %v1899 = vshll.u32 %v1898, 23
      %v1900 = vor.u32 4788187, %v1899
      %v1901 = vand.u32 2147483647, %v1900
      %v1903 = vcvt.s32.f32 %v1896
      %v1904 = vmul.f32 %v1903, %v1901
      %v1905 = vxor.u32 %v1904, 2147483648
      %v1906 = vsel %vm1823, %v1905, %v1904
      %v1907 = vsub.s32 4, %v1883
      %v1908 = vsel %vm1823, %v1907, %v1883
      %v1909 = vsel %vm1822, %v1803, %v1906
      %v1910 = vsel %vm1822, 0, %v1908
      %v1911 = vcosq.f32.pop %v1909
      %v1912 = vsinq.f32.pop %v1909
      %vm1913 = vweird.f32 %v1803
      %v1914 = vadd.s32 %v1910, 3
      %v1915 = vand.u32 %v1914, 3
      %vm1916 = vcmp.lt.s32.totalorder %v1915, 2
      %vm1917 = vcmp.eq.s32.totalorder %v1915, 0
      %v1918 = vxor.u32 %v1912, 2147483648
      %v1919 = vsel %vm1917, %v1911, %v1918
      %vm1920 = vcmp.eq.s32.totalorder %v1915, 2
      %v1921 = vxor.u32 %v1911, 2147483648
      %v1922 = vsel %vm1920, %v1921, %v1912
      %v1923 = vsel %vm1916, %v1919, %v1922
      %v1924 = vsel %vm1913, nan, %v1923
      %v1925 = vand.u32 2147483647, %v1808
      %vm1926 = vcmp.le.f32.partialorder %v1925, 0.7853982
      %vm1927 = vcmp.lt.s32.totalorder %v1808, 0
      %v1928 = vand.u32 %v1808, 2139095040
      %v1929 = vshrl.u32 %v1928, 23
      %v1930 = vsub.s32 %v1929, 127
      %v1931 = vand.u32 2147483647, %v1808
      %v1932 = vand.u32 %v1931, 8388607
      %v1933 = vor.u32 %v1932, 8388608
      %v1934 = vsub.s32 0, %v1933
      %v1935 = vadd.s32 %v1930, 1
      %vm1936 = vcmp.gt.s32.totalorder %v1935, 0
      %v1937 = vsel %vm1936, %v1935, 0
      %v1938 = vshrl.u32 %v1937, 5
      %v1939 = vand.u32 %v1937, 31
      %v1940 = vsub.s32 32, %v1939
      %v1941 = vshrl.u32 683565275, %v1940
      %v1942 = vshll.u32 683565275, %v1939
      %v1943 = vshrl.u32 2475754826, %v1940
      %v1944 = vor.u32 %v1942, %v1943
      %v1945 = vshll.u32 2475754826, %v1939
      %v1946 = vshrl.u32 2131351028, %v1940
      %v1947 = vor.u32 %v1945, %v1946
      %v1948 = vshll.u32 2131351028, %v1939
      %v1949 = vshrl.u32 2102212464, %v1940
      %v1950 = vor.u32 %v1948, %v1949
      %v1951 = vshll.u32 2102212464, %v1939
      %v1952 = vshrl.u32 920167782, %v1940
      %v1953 = vor.u32 %v1951, %v1952
      %v1954 = vshll.u32 920167782, %v1939
      %v1955 = vshrl.u32 1326507024, %v1940
      %v1956 = vor.u32 %v1954, %v1955
      %vm1957 = vcmp.lt.s32.totalorder %v1938, 1
      %vm1958 = vcmp.lt.s32.totalorder %v1938, 2
      %vm1959 = vcmp.lt.s32.totalorder %v1938, 3
      %vm1960 = vcmp.lt.s32.totalorder %v1938, 4
      %v1961 = vsel %vm1957, %v1941, %v1944
      %v1962 = vsel %vm1960, %v1950, 2102212464
      %v1963 = vsel %vm1959, %v1947, %v1962
      %v1964 = vsel %vm1958, %v1961, %v1963
      %v1965 = vsel %vm1957, %v1944, %v1947
      %v1966 = vsel %vm1960, %v1953, 920167782
      %v1967 = vsel %vm1959, %v1950, %v1966
      %v1968 = vsel %vm1958, %v1965, %v1967
      %v1969 = vsel %vm1957, %v1947, %v1950
      %v1970 = vsel %vm1960, %v1956, 1326507024
      %v1971 = vsel %vm1959, %v1953, %v1970
      %v1972 = vsel %vm1958, %v1969, %v1971
      %v1973 = vshll.u32 %v1933, 8
      %v1974 = vmul.u32.u64.compose %v1973, %v1972
      %v1975 = vextract.low.u32 %v1974
      %v1976 = vextract.high.u32 %v1974
      %v1977 = vmul.u32.u64.compose %v1973, %v1968
      %v1978 = vextract.low.u32 %v1977
      %v1979 = vextract.high.u32 %v1977
      %v1980 = vmul.u32 %v1973, %v1964
      %v1981 = vadd.s32 %v1976, %v1978
      %vm1982 = vc.u32 %v1976, %v1978
      %v1983 = vadd.s32 %v1979, 1
      %v1984 = vsel %vm1982, %v1983, %v1979
      %v1985 = vadd.s32 %v1980, %v1984
      %v1986 = vadd.s32 %v1985, 536870912
      %v1987 = vshrl.u32 %v1986, 30
      %v1988 = vshll.u32 %v1987, 30
      %v1989 = vsub.s32 %v1985, %v1988
      %vm1990 = vcmp.lt.s32.totalorder %v1989, 0
      %v1991 = vsub.s32 0, %v1989
      %v1992 = vsel %vm1990, %v1991, %v1989
      %v1993 = vclz %v1992
      %v1994 = vsub.s32 %v1993, 2
      %vm1995 = vcmp.gt.s32.totalorder 0, %v1994
      %v1996 = vsel %vm1995, 0, %v1994
      %v1997 = vsub.s32 32, %v1996
      %v1998 = vshll.u32 %v1989, %v1996
      %v1999 = vshrl.u32 %v1981, %v1997
      %v2000 = vor.u32 %v1998, %v1999
      %v2001 = vsub.s32 4294967266, %v1996
      %v2002 = vadd.s32 %v2001, 127
      %v2003 = vshll.u32 %v2002, 23
      %v2004 = vor.u32 4788187, %v2003
      %v2005 = vand.u32 2147483647, %v2004
      %v2007 = vcvt.s32.f32 %v2000
      %v2008 = vmul.f32 %v2007, %v2005
      %v2009 = vxor.u32 %v2008, 2147483648
      %v2010 = vsel %vm1927, %v2009, %v2008
      %v2011 = vsub.s32 4, %v1987
      %v2012 = vsel %vm1927, %v2011, %v1987
      %v2013 = vsel %vm1926, %v1808, %v2010
      %v2014 = vsel %vm1926, 0, %v2012
      %v2015 = vcosq.f32.pop %v2013
      %v2016 = vsinq.f32.pop %v2013
      %vm2017 = vweird.f32 %v1808
      %v2018 = vadd.s32 %v2014, 3
      %v2019 = vand.u32 %v2018, 3
      %vm2020 = vcmp.lt.s32.totalorder %v2019, 2
      %vm2021 = vcmp.eq.s32.totalorder %v2019, 0
      %v2022 = vxor.u32 %v2016, 2147483648
      %v2023 = vsel %vm2021, %v2015, %v2022
      %vm2024 = vcmp.eq.s32.totalorder %v2019, 2
      %v2025 = vxor.u32 %v2015, 2147483648
      %v2026 = vsel %vm2024, %v2025, %v2016
      %v2027 = vsel %vm2020, %v2023, %v2026
      %v2028 = vsel %vm2017, nan, %v2027
      %v2029 = vand.u32 2147483647, %v1813
      %vm2030 = vcmp.le.f32.partialorder %v2029, 0.7853982
      %vm2031 = vcmp.lt.s32.totalorder %v1813, 0
      %v2032 = vand.u32 %v1813, 2139095040
      %v2033 = vshrl.u32 %v2032, 23
      %v2034 = vsub.s32 %v2033, 127
      %v2035 = vand.u32 2147483647, %v1813
      %v2036 = vand.u32 %v2035, 8388607
      %v2037 = vor.u32 %v2036, 8388608
      %v2038 = vsub.s32 0, %v2037
      %v2039 = vadd.s32 %v2034, 1
      %vm2040 = vcmp.gt.s32.totalorder %v2039, 0
      %v2041 = vsel %vm2040, %v2039, 0
      %v2042 = vshrl.u32 %v2041, 5
      %v2043 = vand.u32 %v2041, 31
      %v2044 = vsub.s32 32, %v2043
      %v2045 = vshrl.u32 683565275, %v2044
      %v2046 = vshll.u32 683565275, %v2043
      %v2047 = vshrl.u32 2475754826, %v2044
      %v2048 = vor.u32 %v2046, %v2047
      %v2049 = vshll.u32 2475754826, %v2043
      %v2050 = vshrl.u32 2131351028, %v2044
      %v2051 = vor.u32 %v2049, %v2050
      %v2052 = vshll.u32 2131351028, %v2043
      %v2053 = vshrl.u32 2102212464, %v2044
      %v2054 = vor.u32 %v2052, %v2053
      %v2055 = vshll.u32 2102212464, %v2043
      %v2056 = vshrl.u32 920167782, %v2044
      %v2057 = vor.u32 %v2055, %v2056
      %v2058 = vshll.u32 920167782, %v2043
      %v2059 = vshrl.u32 1326507024, %v2044
      %v2060 = vor.u32 %v2058, %v2059
      %vm2061 = vcmp.lt.s32.totalorder %v2042, 1
      %vm2062 = vcmp.lt.s32.totalorder %v2042, 2
      %vm2063 = vcmp.lt.s32.totalorder %v2042, 3
      %vm2064 = vcmp.lt.s32.totalorder %v2042, 4
      %v2065 = vsel %vm2061, %v2045, %v2048
      %v2066 = vsel %vm2064, %v2054, 2102212464
      %v2067 = vsel %vm2063, %v2051, %v2066
      %v2068 = vsel %vm2062, %v2065, %v2067
      %v2069 = vsel %vm2061, %v2048, %v2051
      %v2070 = vsel %vm2064, %v2057, 920167782
      %v2071 = vsel %vm2063, %v2054, %v2070
      %v2072 = vsel %vm2062, %v2069, %v2071
      %v2073 = vsel %vm2061, %v2051, %v2054
      %v2074 = vsel %vm2064, %v2060, 1326507024
      %v2075 = vsel %vm2063, %v2057, %v2074
      %v2076 = vsel %vm2062, %v2073, %v2075
      %v2077 = vshll.u32 %v2037, 8
      %v2078 = vmul.u32.u64.compose %v2077, %v2076
      %v2079 = vextract.low.u32 %v2078
      %v2080 = vextract.high.u32 %v2078
      %v2081 = vmul.u32.u64.compose %v2077, %v2072
      %v2082 = vextract.low.u32 %v2081
      %v2083 = vextract.high.u32 %v2081
      %v2084 = vmul.u32 %v2077, %v2068
      %v2085 = vadd.s32 %v2080, %v2082
      %vm2086 = vc.u32 %v2080, %v2082
      %v2087 = vadd.s32 %v2083, 1
      %v2088 = vsel %vm2086, %v2087, %v2083
      %v2089 = vadd.s32 %v2084, %v2088
      %v2090 = vadd.s32 %v2089, 536870912
      %v2091 = vshrl.u32 %v2090, 30
      %v2092 = vshll.u32 %v2091, 30
      %v2093 = vsub.s32 %v2089, %v2092
      %vm2094 = vcmp.lt.s32.totalorder %v2093, 0
      %v2095 = vsub.s32 0, %v2093
      %v2096 = vsel %vm2094, %v2095, %v2093
      %v2097 = vclz %v2096
      %v2098 = vsub.s32 %v2097, 2
      %vm2099 = vcmp.gt.s32.totalorder 0, %v2098
      %v2100 = vsel %vm2099, 0, %v2098
      %v2101 = vsub.s32 32, %v2100
      %v2102 = vshll.u32 %v2093, %v2100
      %v2103 = vshrl.u32 %v2085, %v2101
      %v2104 = vor.u32 %v2102, %v2103
      %v2105 = vsub.s32 4294967266, %v2100
      %v2106 = vadd.s32 %v2105, 127
      %v2107 = vshll.u32 %v2106, 23
      %v2108 = vor.u32 4788187, %v2107
      %v2109 = vand.u32 2147483647, %v2108
      %v2111 = vcvt.s32.f32 %v2104
      %v2112 = vmul.f32 %v2111, %v2109
      %v2113 = vxor.u32 %v2112, 2147483648
      %v2114 = vsel %vm2031, %v2113, %v2112
      %v2115 = vsub.s32 4, %v2091
      %v2116 = vsel %vm2031, %v2115, %v2091
      %v2117 = vsel %vm2030, %v1813, %v2114
      %v2118 = vsel %vm2030, 0, %v2116
      %v2119 = vcosq.f32.pop %v2117
      %v2120 = vsinq.f32.pop %v2117
      %vm2121 = vweird.f32 %v1813
      %v2122 = vadd.s32 %v2118, 3
      %v2123 = vand.u32 %v2122, 3
      %vm2124 = vcmp.lt.s32.totalorder %v2123, 2
      %vm2125 = vcmp.eq.s32.totalorder %v2123, 0
      %v2126 = vxor.u32 %v2120, 2147483648
      %v2127 = vsel %vm2125, %v2119, %v2126
      %vm2128 = vcmp.eq.s32.totalorder %v2123, 2
      %v2129 = vxor.u32 %v2119, 2147483648
      %v2130 = vsel %vm2128, %v2129, %v2120
      %v2131 = vsel %vm2124, %v2127, %v2130
      %v2132 = vsel %vm2121, nan, %v2131
      %v2133 = vand.u32 2147483647, %v1818
      %vm2134 = vcmp.le.f32.partialorder %v2133, 0.7853982
      %vm2135 = vcmp.lt.s32.totalorder %v1818, 0
      %v2136 = vand.u32 %v1818, 2139095040
      %v2137 = vshrl.u32 %v2136, 23
      %v2138 = vsub.s32 %v2137, 127
      %v2139 = vand.u32 2147483647, %v1818
      %v2140 = vand.u32 %v2139, 8388607
      %v2141 = vor.u32 %v2140, 8388608
      %v2142 = vsub.s32 0, %v2141
      %v2143 = vadd.s32 %v2138, 1
      %vm2144 = vcmp.gt.s32.totalorder %v2143, 0
      %v2145 = vsel %vm2144, %v2143, 0
      %v2146 = vshrl.u32 %v2145, 5
      %v2147 = vand.u32 %v2145, 31
      %v2148 = vsub.s32 32, %v2147
      %v2149 = vshrl.u32 683565275, %v2148
      %v2150 = vshll.u32 683565275, %v2147
      %v2151 = vshrl.u32 2475754826, %v2148
      %v2152 = vor.u32 %v2150, %v2151
      %v2153 = vshll.u32 2475754826, %v2147
      %v2154 = vshrl.u32 2131351028, %v2148
      %v2155 = vor.u32 %v2153, %v2154
      %v2156 = vshll.u32 2131351028, %v2147
      %v2157 = vshrl.u32 2102212464, %v2148
      %v2158 = vor.u32 %v2156, %v2157
      %v2159 = vshll.u32 2102212464, %v2147
      %v2160 = vshrl.u32 920167782, %v2148
      %v2161 = vor.u32 %v2159, %v2160
      %v2162 = vshll.u32 920167782, %v2147
      %v2163 = vshrl.u32 1326507024, %v2148
      %v2164 = vor.u32 %v2162, %v2163
      %vm2165 = vcmp.lt.s32.totalorder %v2146, 1
      %vm2166 = vcmp.lt.s32.totalorder %v2146, 2
      %vm2167 = vcmp.lt.s32.totalorder %v2146, 3
      %vm2168 = vcmp.lt.s32.totalorder %v2146, 4
      %v2169 = vsel %vm2165, %v2149, %v2152
      %v2170 = vsel %vm2168, %v2158, 2102212464
      %v2171 = vsel %vm2167, %v2155, %v2170
      %v2172 = vsel %vm2166, %v2169, %v2171
      %v2173 = vsel %vm2165, %v2152, %v2155
      %v2174 = vsel %vm2168, %v2161, 920167782
      %v2175 = vsel %vm2167, %v2158, %v2174
      %v2176 = vsel %vm2166, %v2173, %v2175
      %v2177 = vsel %vm2165, %v2155, %v2158
      %v2178 = vsel %vm2168, %v2164, 1326507024
      %v2179 = vsel %vm2167, %v2161, %v2178
      %v2180 = vsel %vm2166, %v2177, %v2179
      %v2181 = vshll.u32 %v2141, 8
      %v2182 = vmul.u32.u64.compose %v2181, %v2180
      %v2183 = vextract.low.u32 %v2182
      %v2184 = vextract.high.u32 %v2182
      %v2185 = vmul.u32.u64.compose %v2181, %v2176
      %v2186 = vextract.low.u32 %v2185
      %v2187 = vextract.high.u32 %v2185
      %v2188 = vmul.u32 %v2181, %v2172
      %v2189 = vadd.s32 %v2184, %v2186
      %vm2190 = vc.u32 %v2184, %v2186
      %v2191 = vadd.s32 %v2187, 1
      %v2192 = vsel %vm2190, %v2191, %v2187
      %v2193 = vadd.s32 %v2188, %v2192
      %v2194 = vadd.s32 %v2193, 536870912
      %v2195 = vshrl.u32 %v2194, 30
      %v2196 = vshll.u32 %v2195, 30
      %v2197 = vsub.s32 %v2193, %v2196
      %vm2198 = vcmp.lt.s32.totalorder %v2197, 0
      %v2199 = vsub.s32 0, %v2197
      %v2200 = vsel %vm2198, %v2199, %v2197
      %v2201 = vclz %v2200
      %v2202 = vsub.s32 %v2201, 2
      %vm2203 = vcmp.gt.s32.totalorder 0, %v2202
      %v2204 = vsel %vm2203, 0, %v2202
      %v2205 = vsub.s32 32, %v2204
      %v2206 = vshll.u32 %v2197, %v2204
      %v2207 = vshrl.u32 %v2189, %v2205
      %v2208 = vor.u32 %v2206, %v2207
      %v2209 = vsub.s32 4294967266, %v2204
      %v2210 = vadd.s32 %v2209, 127
      %v2211 = vshll.u32 %v2210, 23
      %v2212 = vor.u32 4788187, %v2211
      %v2213 = vand.u32 2147483647, %v2212
      %v2215 = vcvt.s32.f32 %v2208
      %v2216 = vmul.f32 %v2215, %v2213
      %v2217 = vxor.u32 %v2216, 2147483648
      %v2218 = vsel %vm2135, %v2217, %v2216
      %v2219 = vsub.s32 4, %v2195
      %v2220 = vsel %vm2135, %v2219, %v2195
      %v2221 = vsel %vm2134, %v1818, %v2218
      %v2222 = vsel %vm2134, 0, %v2220
      %v2223 = vcosq.f32.pop %v2221
      %v2224 = vsinq.f32.pop %v2221
      %vm2225 = vweird.f32 %v1818
      %v2226 = vadd.s32 %v2222, 3
      %v2227 = vand.u32 %v2226, 3
      %vm2228 = vcmp.lt.s32.totalorder %v2227, 2
      %vm2229 = vcmp.eq.s32.totalorder %v2227, 0
      %v2230 = vxor.u32 %v2224, 2147483648
      %v2231 = vsel %vm2229, %v2223, %v2230
      %vm2232 = vcmp.eq.s32.totalorder %v2227, 2
      %v2233 = vxor.u32 %v2223, 2147483648
      %v2234 = vsel %vm2232, %v2233, %v2224
      %v2235 = vsel %vm2228, %v2231, %v2234
      %v2236 = vsel %vm2225, nan, %v2235
      %v2237 = vld [vmem:[%s1 + $0x80] sm:$0x7]
      %2239 = vset.pattern.permute.xlu0 32
      %2240 = vperm.xlu0 %2239, %v2237
      %v2241 = vpop.permute.xlu0 %2240
      %v2243 = vsel %vm661, %v2237, 0
      %2245 = vmatprep.subr.mxu0 0.0
      %2246 = vmatpush1.msra.mxu0 %v1924
      %2247 = vmatprep.subr.mxu0 0.0
      %2248 = vmatpush1.msra.mxu0 %v2028
      %2249 = vmatprep.subr.mxu0 0.0
      %2250 = vmatpush1.msra.mxu0 %v2132
      %2251 = vmatprep.subr.mxu0 0.0
      %2252 = vmatpush1.msra.mxu0 %v2236
      %2253 = vmatprep.subr.mxu0 0.0
      %2254 = vmatpush1.msra.mxu0 0.0
      %2255 = vmatprep.subr.mxu0 0.0
      %2256 = vmatpush1.msra.mxu0 0.0
      %2257 = vmatprep.subr.mxu0 0.0
      %2258 = vmatpush1.msra.mxu0 0.0
      %2259 = vmatprep.subr.mxu0 0.0
      %2260 = vmatpush1.msra.mxu0 0.0
      %2261 = vmatprep.subr.mxu0 0.0
      %2262 = vmatpush1.msra.mxu0 0.0
      %2263 = vmatprep.subr.mxu0 0.0
      %2264 = vmatpush1.msra.mxu0 0.0
      %2265 = vmatprep.subr.mxu0 0.0
      %2266 = vmatpush1.msra.mxu0 0.0
      %2267 = vmatprep.subr.mxu0 0.0
      %2268 = vmatpush1.msra.mxu0 0.0
      %2269 = vmatprep.subr.mxu0 0.0
      %2270 = vmatpush1.msra.mxu0 0.0
      %2271 = vmatprep.subr.mxu0 0.0
      %2272 = vmatpush1.msra.mxu0 0.0
      %2273 = vmatprep.subr.mxu0 0.0
      %2274 = vmatpush1.msra.mxu0 0.0
      %2275 = vmatprep.subr.mxu0 0.0
      %2276 = vmatpush1.msra.mxu0 0.0
      %2277 = vmatprep.subr.mxu0 0.0
      %2278 = vmatpush1.msra.mxu0 0.0
      %2279 = vmatprep.subr.mxu0 0.0
      %2280 = vmatpush1.msra.mxu0 0.0
      %2281 = vmatprep.subr.mxu0 0.0
      %2282 = vmatpush1.msra.mxu0 0.0
      %2283 = vmatprep.subr.mxu0 0.0
      %2284 = vmatpush1.msra.mxu0 0.0
      %2285 = vmatprep.subr.mxu0 0.0
      %2286 = vmatpush1.msra.mxu0 0.0
      %2287 = vmatprep.subr.mxu0 0.0
      %2288 = vmatpush1.msra.mxu0 0.0
      %2289 = vmatprep.subr.mxu0 0.0
      %2290 = vmatpush1.msra.mxu0 0.0
      %2291 = vmatprep.subr.mxu0 0.0
      %2292 = vmatpush1.msra.mxu0 0.0
      %2293 = vmatprep.subr.mxu0 0.0
      %2294 = vmatpush1.msra.mxu0 0.0
      %2295 = vmatprep.subr.mxu0 0.0
      %2296 = vmatpush1.msra.mxu0 0.0
      %2297 = vmatprep.subr.mxu0 0.0
      %2298 = vmatpush1.msra.mxu0 0.0
      %2299 = vmatprep.subr.mxu0 0.0
      %2300 = vmatpush1.msra.mxu0 0.0
      %2301 = vmatprep.subr.mxu0 0.0
      %2302 = vmatpush1.msra.mxu0 0.0
      %2303 = vmatprep.subr.mxu0 0.0
      %2304 = vmatpush1.msra.mxu0 0.0
      %2305 = vmatprep.subr.mxu0 0.0
      %2306 = vmatpush1.msra.mxu0 0.0
      %2307 = vmatprep.subr.mxu0 0.0
      %2308 = vmatpush1.msra.mxu0 0.0
      %2309 = vmatprep.mubr.f32.mxu0 0.0
      %2310 = vmatmul.mubr.f32.gmra.mrb[0].mxu0 %v2243
      %v2311 = vpop.f32.mrb[0].mxu0
      %v2312 = vadd.f32 %v2241, %v2311
      %v2313 = vpop.f32.mrb[0].mxu0
      %2314 = vdwg.mxu0
      %2315 = vst [vmem:[%s138] sm:$0x7] %v2312
      %p2316 = scmp.lt.s32.totalorder %s13, 1
      %s2317 = scalar_select %p2316, %s13, 1
      %s2318 = smul.addr %s2317, 4
      %s2319 = scalar_lea.vmem %s2, %s2318
      // Predicated region
      $region29: #{siren_render_cm.1} parent=27 // pred_check
        %p2320 = pneg %p78
      $region30: #{siren_render_cm.1} parent=27 // pred_check_branch
        %2322 = sbr.rel (%p2320) target = $region32
      $region31: #{siren_render_cm.1} parent=27 // pred_region
        _
      $region32: #{siren_render_cm.1} parent=27 // pred_fallthru
        _
    $region28: #{siren_render_cm.1} parent=5 // pred_fallthru
      _
    %p2323 = scmp.le.s32.totalorder 2, %s8
    // Predicated region
    $region33: #{siren_render_cm.1} parent=5 // pred_check
      %p2324 = pneg %p2323
    $region34: #{siren_render_cm.1} parent=5 // pred_check_branch
      %2326 = sbr.rel (%p2324) target = $region36
    $region35: #{siren_render_cm.1} parent=5 // pred_region
      %s2327 = ssub.s32 %s8, 2
      // Predicated region
      $region37: #{siren_render_cm.1} parent=35 // pred_check
        %p2328 = pneg %p84
      $region38: #{siren_render_cm.1} parent=35 // pred_check_branch
        %2330 = sbr.rel (%p2328) target = $region40
      $region39: #{siren_render_cm.1} parent=35 // pred_region
        %p2331 = scmp.lt.s32.totalorder %s14, 1
        %s2332 = scalar_select %p2331, %s14, 1
        %s2333 = smul.addr %s2332, 4
        %s2334 = scalar_lea.vmem %s2, %s2333
      $region40: #{siren_render_cm.1} parent=35 // pred_fallthru
        _
    $region36: #{siren_render_cm.1} parent=5 // pred_fallthru
      _
  $region6: #{siren_render_cm.1} parent=0 // loop_footer
    %s12 = sadd.s32 1, %s8
  $region7: #{siren_render_cm.1} parent=0 // loop_footer_branch
    %7 = sbr.rel target = $region3
  $region8: #{siren_render_cm.1} parent=0 // loop_exit
    _

</llo_original>
